<compile_context>
chip_gen: v5e
topology: v5e:2x2
jax: 0.10.0
libtpu: 0.0.40
codegen_flags: <defaults>
</compile_context>

<pallas_src>
import functools
import math

import jax
import jax.numpy as jnp
from jax import lax
from jax.experimental import pallas as pl
from jax.experimental.pallas import tpu as pltpu


def _layer_norm(x, gamma, beta, eps=1e-5):
    mu = jnp.mean(x, axis=-1, keepdims=True)
    var = jnp.mean((x - mu) ** 2, axis=-1, keepdims=True)
    return (x - mu) * lax.rsqrt(var + eps) * gamma + beta


def _encoder_kernel(x_ref, win_ref, bin_ref,
                    wqkv_ref, bqkv_ref, wo_ref, bo_ref,
                    ln1g_ref, ln1b_ref,
                    wff1_ref, bff1_ref, wff2_ref, bff2_ref,
                    ln2g_ref, ln2b_ref,
                    wout_ref, bout_ref,
                    out_ref, h_ref, attn_sc, *, nhead, seq_len):
    l = pl.program_id(1)
    n_layers = pl.num_programs(1)

    N, D = h_ref.shape                 # N = bt * S tokens in this batch tile
    S = seq_len
    bt = N // S
    hd = D // nhead
    cdt = wqkv_ref.dtype               # MXU compute dtype (bf16)
    scale = 1.0 / math.sqrt(hd)

    # ---- prologue (first layer iteration only): input_fc ----
    @pl.when(l == 0)
    def _():
        h_ref[...] = (jnp.dot(x_ref[...], win_ref[...],
                              preferred_element_type=jnp.float32)
                      + bin_ref[...])

    h = h_ref[...]                     # (N, D) f32

    # ---- fused QKV projection: one lane-dense (N,D)@(D,3D) bf16 MXU matmul ----
    qkv = (jnp.dot(h.astype(cdt), wqkv_ref[...],
                   preferred_element_type=jnp.float32) + bqkv_ref[...])
    qkv_b = qkv.astype(cdt)            # bf16 operands for the attention matmuls

    # ---- per-head attention (bf16 MXU ops, f32 accumulation) ----
    # Head outputs are written into attn_sc at static lane offsets, producing the
    # concatenated (N, D) head output for ONE fused (N,D)@(D,D) output projection.
    for hh in range(nhead):
        qh = qkv_b[:, hh * hd:(hh + 1) * hd].reshape(bt, S, hd)
        kh = qkv_b[:, D + hh * hd:D + (hh + 1) * hd].reshape(bt, S, hd)
        vh = qkv_b[:, 2 * D + hh * hd:2 * D + (hh + 1) * hd].reshape(bt, S, hd)
        s = jnp.einsum('bqd,bkd->bqk', qh, kh,
                       preferred_element_type=jnp.float32) * scale
        s = s - jnp.max(s, axis=-1, keepdims=True)
        e = jnp.exp(s)
        p = e * pl.reciprocal(jnp.sum(e, axis=-1, keepdims=True), approx=True)
        oh = jnp.einsum('bqk,bkd->bqd', p.astype(cdt), vh,
                        preferred_element_type=jnp.float32)
        attn_sc[:, hh * hd:(hh + 1) * hd] = oh.reshape(N, hd)

    attn = (jnp.dot(attn_sc[...].astype(cdt), wo_ref[...],
                    preferred_element_type=jnp.float32) + bo_ref[...])
    # dropout = identity (inference)
    h = _layer_norm(h + attn, ln1g_ref[...], ln1b_ref[...])

    # ---- feed-forward, tiled over Dff chunks (never holds an (N, Dff) f32 temp) ----
    hb1 = h.astype(cdt)
    nck = wff1_ref.shape[0]            # number of Dff chunks

    def ff_body(c, acc):
        t = (jnp.dot(hb1, wff1_ref[c], preferred_element_type=jnp.float32)
             + bff1_ref[c])
        t = jnp.maximum(t, 0.0).astype(cdt)          # fused bias+ReLU+bf16 cast
        return acc + jnp.dot(t, wff2_ref[c], preferred_element_type=jnp.float32)

    ff = lax.fori_loop(0, nck, ff_body, jnp.zeros((N, D), jnp.float32))
    ff = ff + bff2_ref[...]
    h = _layer_norm(h + ff, ln2g_ref[...], ln2b_ref[...])
    h_ref[...] = h

    # ---- epilogue (last layer only): mean pool FIRST, then output_fc (affine) ----
    @pl.when(l == n_layers - 1)
    def _():
        pooled = jnp.mean(h.reshape(bt, S, D), axis=1)          # (bt, D)
        out_ref[...] = (jnp.dot(pooled.astype(cdt), wout_ref[...],
                                preferred_element_type=jnp.float32)
                        + bout_ref[...])


# ------------------------- wrapper-side sizing helpers -------------------------

def _vmem_capacity_bytes():
    """Generation-aware VMEM capacity (v5e/v6e: 128 MiB, v7x: 64 MiB per core)."""
    try:
        return int(pltpu.get_tpu_info().vmem_capacity_bytes)
    except Exception:
        return 64 << 20                 # conservative default (v7x)


def _tensorcores_per_chip():
    try:
        kind = jax.devices()[0].device_kind.lower()
    except Exception:
        return 1
    return 2 if any(t in kind for t in ('v7', 'v4', 'v5p')) else 1


def _nbytes(a):
    return int(a.size) * a.dtype.itemsize


def _tile_vmem_bytes(bt, S, Din, D, Dff, nhead, ck,
                     per_layer_w_bytes, shared_w_bytes):
    """Rough per-batch-tile VMEM working set (weights double-buffered)."""
    N = bt * S
    f32b, bf16b = 4, 2
    weights = 2 * (per_layer_w_bytes + shared_w_bytes)
    x_in = 2 * N * Din * bf16b
    scratch = 2 * N * D * f32b                                  # h + attn scratch
    act = (N * 3 * D * (f32b + bf16b)                           # qkv f32 + bf16
           + 2 * nhead * bt * S * S * f32b                      # scores + probs
           + 3 * N * D * f32b                                   # attn / residual / LN
           + N * ck * (f32b + bf16b)                            # one FFN chunk
           + 2 * N * D * f32b)                                  # FFN acc + residual
    out = 2 * bt * D * f32b
    return weights + x_in + scratch + act + out


def _auto_batch_block(B, S, Din, D, Dff, nhead, ck,
                      per_layer_w_bytes, shared_w_bytes, capacity, prefer_tiles):
    """Largest legal batch tile that fits VMEM; prefer >=2 tiles on 2-TC chips."""
    budget = int(capacity * 0.85)
    cands = sorted({B} | {b for b in range(8, B, 8) if B % b == 0}, reverse=True)
    feasible = [b for b in cands
                if _tile_vmem_bytes(b, S, Din, D, Dff, nhead, ck,
                                    per_layer_w_bytes, shared_w_bytes) <= budget]
    if not feasible:
        return cands[-1]                # smallest legal tile; may spill
    if prefer_tiles > 1:
        multi = [b for b in feasible if B // b >= prefer_tiles]
        if multi:
            return multi[0]             # largest tile that still fills both cores
    return feasible[0]                  # minimal weight re-streaming


def transformer_encoder_forward(x, params, *, num_layers, nhead, batch_block=None):
    B, S, Din = x.shape
    D = params['w_in'].shape[1]
    Dff = params['w_ff1'].shape[-1]
    L = num_layers
    assert D % nhead == 0
    assert S % 8 == 0, "seq_len must be a multiple of 8 (sublane-aligned)"

    # FFN lane-chunk size (bounds the f32 FFN intermediate to (N, ff_chunk)).
    ff_chunk = Dff
    for c in (512, 256, 128):
        if Dff > c and Dff % c == 0:
            ff_chunk = c
            break
    nck = Dff // ff_chunk

    layer_keys = ('w_qkv', 'b_qkv', 'w_o', 'b_o', 'ln1_g', 'ln1_b',
                  'w_ff1', 'b_ff1', 'w_ff2', 'b_ff2', 'ln2_g', 'ln2_b')
    shared_keys = ('w_in', 'b_in', 'w_out', 'b_out')
    per_layer_w_bytes = sum(_nbytes(params[k]) for k in layer_keys) // L
    shared_w_bytes = sum(_nbytes(params[k]) for k in shared_keys)

    capacity = _vmem_capacity_bytes()
    if batch_block is None:
        batch_block = _auto_batch_block(B, S, Din, D, Dff, nhead, ff_chunk,
                                        per_layer_w_bytes, shared_w_bytes,
                                        capacity, _tensorcores_per_chip())
    bt = batch_block
    assert B % bt == 0, "batch_block must divide batch"
    assert bt == B or bt % 8 == 0, "partial batch tiles must be sublane-aligned"
    nb = B // bt
    N = bt * S

    # Input: flatten tokens and cast to bf16 in the wrapper (halves input DMA).
    x2 = x.reshape(B * S, Din).astype(params['w_in'].dtype)

    # Chunk-major FFN weight packing: kernel indexes one (D, ck)/(ck, D) slab per step.
    w_ff1 = params['w_ff1'].reshape(L, D, nck, ff_chunk).transpose(0, 2, 1, 3)
    b_ff1 = params['b_ff1'].reshape(L, 1, nck, ff_chunk).transpose(0, 2, 1, 3)
    w_ff2 = params['w_ff2'].reshape(L, nck, ff_chunk, D)

    args = (x2, params['w_in'], params['b_in'],
            params['w_qkv'], params['b_qkv'], params['w_o'], params['b_o'],
            params['ln1_g'], params['ln1_b'],
            w_ff1, b_ff1, w_ff2, params['b_ff2'],
            params['ln2_g'], params['ln2_b'],
            params['w_out'], params['b_out'])

    def per_layer(*blk):       # one layer's slab resident at a time (double-buffered)
        return pl.BlockSpec((None,) + blk, lambda b, l: (l,) + (0,) * len(blk))

    def shared(*blk):          # layer-independent weights (block index l-invariant)
        return pl.BlockSpec(blk, lambda b, l: (0,) * len(blk))

    in_specs = [
        pl.BlockSpec((N, Din), lambda b, l: (b, 0)),            # x (this batch tile)
        shared(Din, D), shared(1, D),                            # w_in, b_in
        per_layer(D, 3 * D), per_layer(1, 3 * D),                # w_qkv, b_qkv (fused)
        per_layer(D, D), per_layer(1, D),                        # w_o, b_o (fused)
        per_layer(1, D), per_layer(1, D),                        # ln1_g, ln1_b
        per_layer(nck, D, ff_chunk), per_layer(nck, 1, ff_chunk),  # w_ff1, b_ff1
        per_layer(nck, ff_chunk, D), per_layer(1, D),            # w_ff2, b_ff2
        per_layer(1, D), per_layer(1, D),                        # ln2_g, ln2_b
        shared(D, D), shared(1, D),                              # w_out, b_out
    ]
    out_specs = pl.BlockSpec((bt, D), lambda b, l: (b, 0))       # resident across l

    needed = _tile_vmem_bytes(bt, S, Din, D, Dff, nhead, ff_chunk,
                              per_layer_w_bytes, shared_w_bytes)
    vmem_limit = int(min(capacity * 0.92, max(32 << 20, needed * 1.25)))

    # Advisory cost estimate for XLA scheduling.
    tokens = B * S
    flops = (2 * tokens * Din * D + 2 * B * D * D
             + L * (2 * tokens * D * 3 * D                       # fused QKV
                    + 4 * tokens * S * D                         # scores + P.V
                    + 2 * tokens * D * D                         # out projection
                    + 4 * tokens * D * Dff))                     # FFN
    transcendentals = L * (nhead * B * S * S + 4 * tokens)
    bytes_accessed = (_nbytes(x2) + B * D * 4
                      + nb * (per_layer_w_bytes * L + shared_w_bytes))

    return pl.pallas_call(
        functools.partial(_encoder_kernel, nhead=nhead, seq_len=S),
        out_shape=jax.ShapeDtypeStruct((B, D), jnp.float32),
        grid_spec=pltpu.PrefetchScalarGridSpec(
            num_scalar_prefetch=0,
            grid=(nb, num_layers),
            in_specs=in_specs,
            out_specs=out_specs,
            scratch_shapes=[pltpu.VMEM((N, D), jnp.float32),     # persistent h
                            pltpu.VMEM((N, D), jnp.float32)]),   # concat head outputs
        compiler_params=pltpu.CompilerParams(
            dimension_semantics=("parallel", "arbitrary"),
            vmem_limit_bytes=vmem_limit),
        cost_estimate=pl.CostEstimate(flops=int(flops),
                                      transcendentals=int(transcendentals),
                                      bytes_accessed=int(bytes_accessed)),
    )(*args)


def init_params(key, input_dim, model_dim, num_layers, nhead, dim_feedforward,
                weight_dtype=jnp.bfloat16):
    """Deterministic synthetic parameters (Linear-style uniform init).

    QKV projection weights are pre-fused into a lane-dense (L, D, 3D) slab and the
    output projection is (L, D, D).  Matmul weights are bf16; biases / LayerNorm
    parameters stay f32 (elementwise math runs in f32, v5e-friendly)."""
    D, L, Dff = model_dim, num_layers, dim_feedforward
    keys = iter(jax.random.split(key, 64))

    def w(shape, fan_in, dtype):
        bound = 1.0 / math.sqrt(fan_in)
        return jax.random.uniform(next(keys), shape, jnp.float32,
                                  -bound, bound).astype(dtype)

    wd, f32 = weight_dtype, jnp.float32
    return {
        'w_in':  w((input_dim, D), input_dim, wd), 'b_in': w((1, D), input_dim, f32),
        'w_qkv': w((L, D, 3 * D), D, wd),          'b_qkv': w((L, 1, 3 * D), D, f32),
        'w_o':   w((L, D, D), D, wd),              'b_o':   w((L, 1, D), D, f32),
        'ln1_g': jnp.ones((L, 1, D), f32),         'ln1_b': jnp.zeros((L, 1, D), f32),
        'w_ff1': w((L, D, Dff), D, wd),            'b_ff1': w((L, 1, Dff), D, f32),
        'w_ff2': w((L, Dff, D), Dff, wd),          'b_ff2': w((L, 1, D), Dff, f32),
        'ln2_g': jnp.ones((L, 1, D), f32),         'ln2_b': jnp.zeros((L, 1, D), f32),
        'w_out': w((D, D), D, wd),                 'b_out': w((1, D), D, f32),
    }


def reference_forward(x, p, *, num_layers, nhead):
    """Pure-JAX f32 reference with the same parameter values (weights upcast)."""
    B, S, Din = x.shape
    D = p['w_in'].shape[1]
    hd = D // nhead
    f32 = lambda a: a.astype(jnp.float32)
    h = x.reshape(B * S, Din) @ f32(p['w_in']) + p['b_in']
    for l in range(num_layers):
        qkv = h @ f32(p['w_qkv'][l]) + p['b_qkv'][l]
        q, k, v = jnp.split(qkv, 3, axis=-1)
        sh = lambda a: a.reshape(B, S, nhead, hd).transpose(0, 2, 1, 3)
        q, k, v = sh(q), sh(k), sh(v)
        s = jnp.einsum('bhqd,bhkd->bhqk', q, k) / math.sqrt(hd)
        a = jnp.einsum('bhqk,bhkd->bhqd', jax.nn.softmax(s, axis=-1), v)
        a = a.transpose(0, 2, 1, 3).reshape(B * S, D)
        attn = a @ f32(p['w_o'][l]) + p['b_o'][l]
        h = _layer_norm(h + attn, p['ln1_g'][l], p['ln1_b'][l])
        ff = jnp.maximum(h @ f32(p['w_ff1'][l]) + p['b_ff1'][l], 0.0)
        ff = ff @ f32(p['w_ff2'][l]) + p['b_ff2'][l]
        h = _layer_norm(h + ff, p['ln2_g'][l], p['ln2_b'][l])
    y = h @ f32(p['w_out']) + p['b_out']
    return y.reshape(B, S, D).mean(axis=1)


if __name__ == "__main__":
    # Small shapes consistent with the module's forward contract.
    B, S = 2, 8
    input_dim, model_dim = 16, 32
    num_layers, nhead = 2, 4
    dim_feedforward = 2048  # PyTorch nn.TransformerEncoderLayer default

    key = jax.random.PRNGKey(0)
    kx, kp = jax.random.split(key)
    x = jax.random.normal(kx, (B, S, input_dim), jnp.float32)
    params = init_params(kp, input_dim, model_dim, num_layers, nhead, dim_feedforward)

    out = jax.block_until_ready(
        transformer_encoder_forward(x, params, num_layers=num_layers, nhead=nhead))
    ref = reference_forward(x, params, num_layers=num_layers, nhead=nhead)

    assert out.shape == (B, model_dim), out.shape
    # bf16 matmul operands + approx reciprocal => loosened tolerance vs f32 reference.
    err = float(jnp.max(jnp.abs(out - ref)))
    assert err < 5e-2, err
    print("KERNEL_OK")
</pallas_src>

<mosaic_0001>
module attributes {stable_mosaic.version = 11 : i64} {
  func.func @_encoder_kernel(%arg0: i32, %arg1: i32, %arg2: memref<16x16xbf16, #tpu.memory_space<vmem>>, %arg3: memref<16x32xbf16, #tpu.memory_space<vmem>>, %arg4: memref<1x32xf32, #tpu.memory_space<vmem>>, %arg5: memref<1x32x96xbf16, #tpu.memory_space<vmem>>, %arg6: memref<1x1x96xf32, #tpu.memory_space<vmem>>, %arg7: memref<1x32x32xbf16, #tpu.memory_space<vmem>>, %arg8: memref<1x1x32xf32, #tpu.memory_space<vmem>>, %arg9: memref<1x1x32xf32, #tpu.memory_space<vmem>>, %arg10: memref<1x1x32xf32, #tpu.memory_space<vmem>>, %arg11: memref<1x4x32x512xbf16, #tpu.memory_space<vmem>>, %arg12: memref<1x4x1x512xf32, #tpu.memory_space<vmem>>, %arg13: memref<1x4x512x32xbf16, #tpu.memory_space<vmem>>, %arg14: memref<1x1x32xf32, #tpu.memory_space<vmem>>, %arg15: memref<1x1x32xf32, #tpu.memory_space<vmem>>, %arg16: memref<1x1x32xf32, #tpu.memory_space<vmem>>, %arg17: memref<32x32xbf16, #tpu.memory_space<vmem>>, %arg18: memref<1x32xf32, #tpu.memory_space<vmem>>, %arg19: memref<2x32xf32, #tpu.memory_space<vmem>>, %arg20: memref<16x32xf32, #tpu.memory_space<vmem>>, %arg21: memref<16x32xf32, #tpu.memory_space<vmem>>) attributes {dimension_semantics = [#tpu.dimension_semantics<parallel>, #tpu.dimension_semantics<arbitrary>], iteration_bounds = array<i64: 1, 2>, scalar_prefetch = 0 : i64, scratch_operands = 2 : i64, tpu.core_type = #tpu.core_type<tc>, window_params = [{transform_indices = @transform_0, window_bounds = array<i64: 16, 16>}, {pipeline_mode = #tpu.pipeline_mode<synchronous>, transform_indices = @transform_1, window_bounds = array<i64: 16, 32>}, {pipeline_mode = #tpu.pipeline_mode<synchronous>, transform_indices = @transform_2, window_bounds = array<i64: 1, 32>}, {transform_indices = @transform_3, window_bounds = array<i64: 1, 32, 96>}, {transform_indices = @transform_4, window_bounds = array<i64: 1, 1, 96>}, {transform_indices = @transform_5, window_bounds = array<i64: 1, 32, 32>}, {transform_indices = @transform_6, window_bounds = array<i64: 1, 1, 32>}, {transform_indices = @transform_7, window_bounds = array<i64: 1, 1, 32>}, {transform_indices = @transform_8, window_bounds = array<i64: 1, 1, 32>}, {transform_indices = @transform_9, window_bounds = array<i64: 1, 4, 32, 512>}, {transform_indices = @transform_10, window_bounds = array<i64: 1, 4, 1, 512>}, {transform_indices = @transform_11, window_bounds = array<i64: 1, 4, 512, 32>}, {transform_indices = @transform_12, window_bounds = array<i64: 1, 1, 32>}, {transform_indices = @transform_13, window_bounds = array<i64: 1, 1, 32>}, {transform_indices = @transform_14, window_bounds = array<i64: 1, 1, 32>}, {pipeline_mode = #tpu.pipeline_mode<synchronous>, transform_indices = @transform_15, window_bounds = array<i64: 32, 32>}, {pipeline_mode = #tpu.pipeline_mode<synchronous>, transform_indices = @transform_16, window_bounds = array<i64: 1, 32>}, {transform_indices = @transform_17, window_bounds = array<i64: 2, 32>}]} {
    %c0_i32 = arith.constant 0 : i32
    %0 = arith.cmpi eq, %arg1, %c0_i32 : i32
    %1 = arith.extui %0 : i1 to i32
    %c0_i32_0 = arith.constant 0 : i32
    %2 = arith.cmpi ne, %1, %c0_i32_0 : i32
    scf.if %2 {
      %c0_74 = arith.constant 0 : index
      %c0_75 = arith.constant 0 : index
      %180 = vector.load %arg2[%c0_74, %c0_75] : memref<16x16xbf16, #tpu.memory_space<vmem>>, vector<16x16xbf16>
      %c0_76 = arith.constant 0 : index
      %c0_77 = arith.constant 0 : index
      %181 = vector.load %arg3[%c0_76, %c0_77] : memref<16x32xbf16, #tpu.memory_space<vmem>>, vector<16x32xbf16>
      %cst_78 = arith.constant dense<0.000000e+00> : vector<16x32xf32>
      %182 = tpu.matmul %180, %181, %cst_78 {dimension_numbers = #tpu.dot_dimension_numbers<[1], [0], [0], [1], [0, 0, 1, 1], [], []>} : vector<16x16xbf16>, vector<16x32xbf16>, vector<16x32xf32> -> vector<16x32xf32>
      %c0_79 = arith.constant 0 : index
      %c0_80 = arith.constant 0 : index
      %183 = vector.load %arg4[%c0_79, %c0_80] : memref<1x32xf32, #tpu.memory_space<vmem>>, vector<1x32xf32>
      %184 = vector.broadcast %183 : vector<1x32xf32> to vector<16x32xf32>
      %185 = arith.addf %182, %184 : vector<16x32xf32>
      %c0_81 = arith.constant 0 : index
      %c0_82 = arith.constant 0 : index
      %186 = vector.load %arg20[%c0_81, %c0_82] : memref<16x32xf32, #tpu.memory_space<vmem>>, vector<16x32xf32>
      tpu.vector_store %arg20[%c0_81, %c0_82], %185 {strides = array<i32>} : memref<16x32xf32, #tpu.memory_space<vmem>>, vector<16x32xf32>,
    } else {
    }
    %c0 = arith.constant 0 : index
    %c0_1 = arith.constant 0 : index
    %3 = vector.load %arg20[%c0, %c0_1] : memref<16x32xf32, #tpu.memory_space<vmem>>, vector<16x32xf32>
    %4 = arith.truncf %3 : vector<16x32xf32> to vector<16x32xbf16>
    %c0_2 = arith.constant 0 : index
    %c0_3 = arith.constant 0 : index
    %c0_4 = arith.constant 0 : index
    %5 = vector.load %arg5[%c0_2, %c0_3, %c0_4] : memref<1x32x96xbf16, #tpu.memory_space<vmem>>, vector<1x32x96xbf16>
    %6 = vector.shape_cast %5 : vector<1x32x96xbf16> to vector<32x96xbf16>
    %cst = arith.constant dense<0.000000e+00> : vector<16x96xf32>
    %7 = tpu.matmul %4, %6, %cst {dimension_numbers = #tpu.dot_dimension_numbers<[1], [0], [0], [1], [0, 0, 1, 1], [], []>} : vector<16x32xbf16>, vector<32x96xbf16>, vector<16x96xf32> -> vector<16x96xf32>
    %c0_5 = arith.constant 0 : index
    %c0_6 = arith.constant 0 : index
    %c0_7 = arith.constant 0 : index
    %8 = vector.load %arg6[%c0_5, %c0_6, %c0_7] : memref<1x1x96xf32, #tpu.memory_space<vmem>>, vector<1x1x96xf32>
    %9 = vector.shape_cast %8 : vector<1x1x96xf32> to vector<1x96xf32>
    %10 = vector.broadcast %9 : vector<1x96xf32> to vector<16x96xf32>
    %11 = arith.addf %7, %10 : vector<16x96xf32>
    %12 = arith.truncf %11 : vector<16x96xf32> to vector<16x96xbf16>
    %13 = vector.extract_strided_slice %12 {offsets = [0, 0], sizes = [16, 8], strides = [1, 1]} : vector<16x96xbf16> to vector<16x8xbf16>
    %14 = vector.shape_cast %13 : vector<16x8xbf16> to vector<2x8x8xbf16>
    %15 = vector.extract_strided_slice %12 {offsets = [0, 32], sizes = [16, 8], strides = [1, 1]} : vector<16x96xbf16> to vector<16x8xbf16>
    %16 = vector.shape_cast %15 : vector<16x8xbf16> to vector<2x8x8xbf16>
    %17 = vector.extract_strided_slice %12 {offsets = [0, 64], sizes = [16, 8], strides = [1, 1]} : vector<16x96xbf16> to vector<16x8xbf16>
    %18 = vector.shape_cast %17 : vector<16x8xbf16> to vector<2x8x8xbf16>
    "tpu.trace_start"() <{level = 10 : i32, message = "bqd,bkd->bqk"}> : () -> ()
    %cst_8 = arith.constant dense<0.000000e+00> : vector<2x8x8xf32>
    %19 = tpu.matmul %14, %16, %cst_8 {dimension_numbers = #tpu.dot_dimension_numbers<[2], [2], [1], [1], [0, 0, 0, 1, 1, 1], [0], [0]>} : vector<2x8x8xbf16>, vector<2x8x8xbf16>, vector<2x8x8xf32> -> vector<2x8x8xf32>
    "tpu.trace_stop"() : () -> ()
    %cst_9 = arith.constant 0.353553385 : f32
    %20 = vector.broadcast %cst_9 : f32 to vector<2x8x8xf32>
    %21 = arith.mulf %19, %20 : vector<2x8x8xf32>
    %cst_10 = arith.constant dense<0xFF800000> : vector<2x8xf32>
    %22 = vector.multi_reduction <maximumf>, %21, %cst_10 [2] : vector<2x8x8xf32> to vector<2x8xf32>
    %23 = vector.shape_cast %22 : vector<2x8xf32> to vector<2x8x1xf32>
    %24 = vector.broadcast %23 : vector<2x8x1xf32> to vector<2x8x8xf32>
    %25 = arith.subf %21, %24 : vector<2x8x8xf32>
    %26 = math.exp %25 : vector<2x8x8xf32>
    %cst_11 = arith.constant dense<0.000000e+00> : vector<2x8xf32>
    %27 = vector.multi_reduction <add>, %26, %cst_11 [2] : vector<2x8x8xf32> to vector<2x8xf32>
    %28 = vector.shape_cast %27 : vector<2x8xf32> to vector<2x8x1xf32>
    %29 = tpu.reciprocal %28 {approx = true} : vector<2x8x1xf32> -> vector<2x8x1xf32>
    %30 = vector.broadcast %29 : vector<2x8x1xf32> to vector<2x8x8xf32>
    %31 = arith.mulf %26, %30 : vector<2x8x8xf32>
    %32 = arith.truncf %31 : vector<2x8x8xf32> to vector<2x8x8xbf16>
    "tpu.trace_start"() <{level = 10 : i32, message = "bqk,bkd->bqd"}> : () -> ()
    %cst_12 = arith.constant dense<0.000000e+00> : vector<2x8x8xf32>
    %33 = tpu.matmul %32, %18, %cst_12 {dimension_numbers = #tpu.dot_dimension_numbers<[2], [1], [1], [2], [0, 0, 0, 1, 1, 2], [0], [0]>} : vector<2x8x8xbf16>, vector<2x8x8xbf16>, vector<2x8x8xf32> -> vector<2x8x8xf32>
    "tpu.trace_stop"() : () -> ()
    %34 = vector.shape_cast %33 : vector<2x8x8xf32> to vector<16x8xf32>
    %c0_13 = arith.constant 0 : index
    %c0_14 = arith.constant 0 : index
    %35 = vector.load %arg21[%c0_13, %c0_14] : memref<16x32xf32, #tpu.memory_space<vmem>>, vector<16x8xf32>
    tpu.vector_store %arg21[%c0_13, %c0_14], %34 {strides = array<i32>} : memref<16x32xf32, #tpu.memory_space<vmem>>, vector<16x8xf32>,
    %36 = vector.extract_strided_slice %12 {offsets = [0, 8], sizes = [16, 8], strides = [1, 1]} : vector<16x96xbf16> to vector<16x8xbf16>
    %37 = vector.shape_cast %36 : vector<16x8xbf16> to vector<2x8x8xbf16>
    %38 = vector.extract_strided_slice %12 {offsets = [0, 40], sizes = [16, 8], strides = [1, 1]} : vector<16x96xbf16> to vector<16x8xbf16>
    %39 = vector.shape_cast %38 : vector<16x8xbf16> to vector<2x8x8xbf16>
    %40 = vector.extract_strided_slice %12 {offsets = [0, 72], sizes = [16, 8], strides = [1, 1]} : vector<16x96xbf16> to vector<16x8xbf16>
    %41 = vector.shape_cast %40 : vector<16x8xbf16> to vector<2x8x8xbf16>
    "tpu.trace_start"() <{level = 10 : i32, message = "bqd,bkd->bqk"}> : () -> ()
    %cst_15 = arith.constant dense<0.000000e+00> : vector<2x8x8xf32>
    %42 = tpu.matmul %37, %39, %cst_15 {dimension_numbers = #tpu.dot_dimension_numbers<[2], [2], [1], [1], [0, 0, 0, 1, 1, 1], [0], [0]>} : vector<2x8x8xbf16>, vector<2x8x8xbf16>, vector<2x8x8xf32> -> vector<2x8x8xf32>
    "tpu.trace_stop"() : () -> ()
    %cst_16 = arith.constant 0.353553385 : f32
    %43 = vector.broadcast %cst_16 : f32 to vector<2x8x8xf32>
    %44 = arith.mulf %42, %43 : vector<2x8x8xf32>
    %cst_17 = arith.constant dense<0xFF800000> : vector<2x8xf32>
    %45 = vector.multi_reduction <maximumf>, %44, %cst_17 [2] : vector<2x8x8xf32> to vector<2x8xf32>
    %46 = vector.shape_cast %45 : vector<2x8xf32> to vector<2x8x1xf32>
    %47 = vector.broadcast %46 : vector<2x8x1xf32> to vector<2x8x8xf32>
    %48 = arith.subf %44, %47 : vector<2x8x8xf32>
    %49 = math.exp %48 : vector<2x8x8xf32>
    %cst_18 = arith.constant dense<0.000000e+00> : vector<2x8xf32>
    %50 = vector.multi_reduction <add>, %49, %cst_18 [2] : vector<2x8x8xf32> to vector<2x8xf32>
    %51 = vector.shape_cast %50 : vector<2x8xf32> to vector<2x8x1xf32>
    %52 = tpu.reciprocal %51 {approx = true} : vector<2x8x1xf32> -> vector<2x8x1xf32>
    %53 = vector.broadcast %52 : vector<2x8x1xf32> to vector<2x8x8xf32>
    %54 = arith.mulf %49, %53 : vector<2x8x8xf32>
    %55 = arith.truncf %54 : vector<2x8x8xf32> to vector<2x8x8xbf16>
    "tpu.trace_start"() <{level = 10 : i32, message = "bqk,bkd->bqd"}> : () -> ()
    %cst_19 = arith.constant dense<0.000000e+00> : vector<2x8x8xf32>
    %56 = tpu.matmul %55, %41, %cst_19 {dimension_numbers = #tpu.dot_dimension_numbers<[2], [1], [1], [2], [0, 0, 0, 1, 1, 2], [0], [0]>} : vector<2x8x8xbf16>, vector<2x8x8xbf16>, vector<2x8x8xf32> -> vector<2x8x8xf32>
    "tpu.trace_stop"() : () -> ()
    %57 = vector.shape_cast %56 : vector<2x8x8xf32> to vector<16x8xf32>
    %c0_20 = arith.constant 0 : index
    %c8 = arith.constant 8 : index
    %58 = vector.load %arg21[%c0_20, %c8] : memref<16x32xf32, #tpu.memory_space<vmem>>, vector<16x8xf32>
    tpu.vector_store %arg21[%c0_20, %c8], %57 {strides = array<i32>} : memref<16x32xf32, #tpu.memory_space<vmem>>, vector<16x8xf32>,
    %59 = vector.extract_strided_slice %12 {offsets = [0, 16], sizes = [16, 8], strides = [1, 1]} : vector<16x96xbf16> to vector<16x8xbf16>
    %60 = vector.shape_cast %59 : vector<16x8xbf16> to vector<2x8x8xbf16>
    %61 = vector.extract_strided_slice %12 {offsets = [0, 48], sizes = [16, 8], strides = [1, 1]} : vector<16x96xbf16> to vector<16x8xbf16>
    %62 = vector.shape_cast %61 : vector<16x8xbf16> to vector<2x8x8xbf16>
    %63 = vector.extract_strided_slice %12 {offsets = [0, 80], sizes = [16, 8], strides = [1, 1]} : vector<16x96xbf16> to vector<16x8xbf16>
    %64 = vector.shape_cast %63 : vector<16x8xbf16> to vector<2x8x8xbf16>
    "tpu.trace_start"() <{level = 10 : i32, message = "bqd,bkd->bqk"}> : () -> ()
    %cst_21 = arith.constant dense<0.000000e+00> : vector<2x8x8xf32>
    %65 = tpu.matmul %60, %62, %cst_21 {dimension_numbers = #tpu.dot_dimension_numbers<[2], [2], [1], [1], [0, 0, 0, 1, 1, 1], [0], [0]>} : vector<2x8x8xbf16>, vector<2x8x8xbf16>, vector<2x8x8xf32> -> vector<2x8x8xf32>
    "tpu.trace_stop"() : () -> ()
    %cst_22 = arith.constant 0.353553385 : f32
    %66 = vector.broadcast %cst_22 : f32 to vector<2x8x8xf32>
    %67 = arith.mulf %65, %66 : vector<2x8x8xf32>
    %cst_23 = arith.constant dense<0xFF800000> : vector<2x8xf32>
    %68 = vector.multi_reduction <maximumf>, %67, %cst_23 [2] : vector<2x8x8xf32> to vector<2x8xf32>
    %69 = vector.shape_cast %68 : vector<2x8xf32> to vector<2x8x1xf32>
    %70 = vector.broadcast %69 : vector<2x8x1xf32> to vector<2x8x8xf32>
    %71 = arith.subf %67, %70 : vector<2x8x8xf32>
    %72 = math.exp %71 : vector<2x8x8xf32>
    %cst_24 = arith.constant dense<0.000000e+00> : vector<2x8xf32>
    %73 = vector.multi_reduction <add>, %72, %cst_24 [2] : vector<2x8x8xf32> to vector<2x8xf32>
    %74 = vector.shape_cast %73 : vector<2x8xf32> to vector<2x8x1xf32>
    %75 = tpu.reciprocal %74 {approx = true} : vector<2x8x1xf32> -> vector<2x8x1xf32>
    %76 = vector.broadcast %75 : vector<2x8x1xf32> to vector<2x8x8xf32>
    %77 = arith.mulf %72, %76 : vector<2x8x8xf32>
    %78 = arith.truncf %77 : vector<2x8x8xf32> to vector<2x8x8xbf16>
    "tpu.trace_start"() <{level = 10 : i32, message = "bqk,bkd->bqd"}> : () -> ()
    %cst_25 = arith.constant dense<0.000000e+00> : vector<2x8x8xf32>
    %79 = tpu.matmul %78, %64, %cst_25 {dimension_numbers = #tpu.dot_dimension_numbers<[2], [1], [1], [2], [0, 0, 0, 1, 1, 2], [0], [0]>} : vector<2x8x8xbf16>, vector<2x8x8xbf16>, vector<2x8x8xf32> -> vector<2x8x8xf32>
    "tpu.trace_stop"() : () -> ()
    %80 = vector.shape_cast %79 : vector<2x8x8xf32> to vector<16x8xf32>
    %c0_26 = arith.constant 0 : index
    %c16 = arith.constant 16 : index
    %81 = vector.load %arg21[%c0_26, %c16] : memref<16x32xf32, #tpu.memory_space<vmem>>, vector<16x8xf32>
    tpu.vector_store %arg21[%c0_26, %c16], %80 {strides = array<i32>} : memref<16x32xf32, #tpu.memory_space<vmem>>, vector<16x8xf32>,
    %82 = vector.extract_strided_slice %12 {offsets = [0, 24], sizes = [16, 8], strides = [1, 1]} : vector<16x96xbf16> to vector<16x8xbf16>
    %83 = vector.shape_cast %82 : vector<16x8xbf16> to vector<2x8x8xbf16>
    %84 = vector.extract_strided_slice %12 {offsets = [0, 56], sizes = [16, 8], strides = [1, 1]} : vector<16x96xbf16> to vector<16x8xbf16>
    %85 = vector.shape_cast %84 : vector<16x8xbf16> to vector<2x8x8xbf16>
    %86 = vector.extract_strided_slice %12 {offsets = [0, 88], sizes = [16, 8], strides = [1, 1]} : vector<16x96xbf16> to vector<16x8xbf16>
    %87 = vector.shape_cast %86 : vector<16x8xbf16> to vector<2x8x8xbf16>
    "tpu.trace_start"() <{level = 10 : i32, message = "bqd,bkd->bqk"}> : () -> ()
    %cst_27 = arith.constant dense<0.000000e+00> : vector<2x8x8xf32>
    %88 = tpu.matmul %83, %85, %cst_27 {dimension_numbers = #tpu.dot_dimension_numbers<[2], [2], [1], [1], [0, 0, 0, 1, 1, 1], [0], [0]>} : vector<2x8x8xbf16>, vector<2x8x8xbf16>, vector<2x8x8xf32> -> vector<2x8x8xf32>
    "tpu.trace_stop"() : () -> ()
    %cst_28 = arith.constant 0.353553385 : f32
    %89 = vector.broadcast %cst_28 : f32 to vector<2x8x8xf32>
    %90 = arith.mulf %88, %89 : vector<2x8x8xf32>
    %cst_29 = arith.constant dense<0xFF800000> : vector<2x8xf32>
    %91 = vector.multi_reduction <maximumf>, %90, %cst_29 [2] : vector<2x8x8xf32> to vector<2x8xf32>
    %92 = vector.shape_cast %91 : vector<2x8xf32> to vector<2x8x1xf32>
    %93 = vector.broadcast %92 : vector<2x8x1xf32> to vector<2x8x8xf32>
    %94 = arith.subf %90, %93 : vector<2x8x8xf32>
    %95 = math.exp %94 : vector<2x8x8xf32>
    %cst_30 = arith.constant dense<0.000000e+00> : vector<2x8xf32>
    %96 = vector.multi_reduction <add>, %95, %cst_30 [2] : vector<2x8x8xf32> to vector<2x8xf32>
    %97 = vector.shape_cast %96 : vector<2x8xf32> to vector<2x8x1xf32>
    %98 = tpu.reciprocal %97 {approx = true} : vector<2x8x1xf32> -> vector<2x8x1xf32>
    %99 = vector.broadcast %98 : vector<2x8x1xf32> to vector<2x8x8xf32>
    %100 = arith.mulf %95, %99 : vector<2x8x8xf32>
    %101 = arith.truncf %100 : vector<2x8x8xf32> to vector<2x8x8xbf16>
    "tpu.trace_start"() <{level = 10 : i32, message = "bqk,bkd->bqd"}> : () -> ()
    %cst_31 = arith.constant dense<0.000000e+00> : vector<2x8x8xf32>
    %102 = tpu.matmul %101, %87, %cst_31 {dimension_numbers = #tpu.dot_dimension_numbers<[2], [1], [1], [2], [0, 0, 0, 1, 1, 2], [0], [0]>} : vector<2x8x8xbf16>, vector<2x8x8xbf16>, vector<2x8x8xf32> -> vector<2x8x8xf32>
    "tpu.trace_stop"() : () -> ()
    %103 = vector.shape_cast %102 : vector<2x8x8xf32> to vector<16x8xf32>
    %c0_32 = arith.constant 0 : index
    %c24 = arith.constant 24 : index
    %104 = vector.load %arg21[%c0_32, %c24] : memref<16x32xf32, #tpu.memory_space<vmem>>, vector<16x8xf32>
    tpu.vector_store %arg21[%c0_32, %c24], %103 {strides = array<i32>} : memref<16x32xf32, #tpu.memory_space<vmem>>, vector<16x8xf32>,
    %c0_33 = arith.constant 0 : index
    %c0_34 = arith.constant 0 : index
    %105 = vector.load %arg21[%c0_33, %c0_34] : memref<16x32xf32, #tpu.memory_space<vmem>>, vector<16x32xf32>
    %106 = arith.truncf %105 : vector<16x32xf32> to vector<16x32xbf16>
    %c0_35 = arith.constant 0 : index
    %c0_36 = arith.constant 0 : index
    %c0_37 = arith.constant 0 : index
    %107 = vector.load %arg7[%c0_35, %c0_36, %c0_37] : memref<1x32x32xbf16, #tpu.memory_space<vmem>>, vector<1x32x32xbf16>
    %108 = vector.shape_cast %107 : vector<1x32x32xbf16> to vector<32x32xbf16>
    %cst_38 = arith.constant dense<0.000000e+00> : vector<16x32xf32>
    %109 = tpu.matmul %106, %108, %cst_38 {dimension_numbers = #tpu.dot_dimension_numbers<[1], [0], [0], [1], [0, 0, 1, 1], [], []>} : vector<16x32xbf16>, vector<32x32xbf16>, vector<16x32xf32> -> vector<16x32xf32>
    %c0_39 = arith.constant 0 : index
    %c0_40 = arith.constant 0 : index
    %c0_41 = arith.constant 0 : index
    %110 = vector.load %arg8[%c0_39, %c0_40, %c0_41] : memref<1x1x32xf32, #tpu.memory_space<vmem>>, vector<1x1x32xf32>
    %111 = vector.shape_cast %110 : vector<1x1x32xf32> to vector<1x32xf32>
    %112 = vector.broadcast %111 : vector<1x32xf32> to vector<16x32xf32>
    %113 = arith.addf %109, %112 : vector<16x32xf32>
    %114 = arith.addf %3, %113 : vector<16x32xf32>
    %c0_42 = arith.constant 0 : index
    %c0_43 = arith.constant 0 : index
    %c0_44 = arith.constant 0 : index
    %115 = vector.load %arg9[%c0_42, %c0_43, %c0_44] : memref<1x1x32xf32, #tpu.memory_space<vmem>>, vector<1x1x32xf32>
    %116 = vector.shape_cast %115 : vector<1x1x32xf32> to vector<1x32xf32>
    %c0_45 = arith.constant 0 : index
    %c0_46 = arith.constant 0 : index
    %c0_47 = arith.constant 0 : index
    %117 = vector.load %arg10[%c0_45, %c0_46, %c0_47] : memref<1x1x32xf32, #tpu.memory_space<vmem>>, vector<1x1x32xf32>
    %118 = vector.shape_cast %117 : vector<1x1x32xf32> to vector<1x32xf32>
    %cst_48 = arith.constant dense<0.000000e+00> : vector<16xf32>
    %119 = vector.multi_reduction <add>, %114, %cst_48 [1] : vector<16x32xf32> to vector<16xf32>
    %120 = vector.shape_cast %119 : vector<16xf32> to vector<16x1xf32>
    %cst_49 = arith.constant 3.200000e+01 : f32
    %121 = vector.broadcast %cst_49 : f32 to vector<16x1xf32>
    %122 = arith.divf %120, %121 : vector<16x1xf32>
    %123 = vector.broadcast %122 : vector<16x1xf32> to vector<16x32xf32>
    %124 = arith.subf %114, %123 : vector<16x32xf32>
    %125 = arith.mulf %124, %124 : vector<16x32xf32>
    %cst_50 = arith.constant dense<0.000000e+00> : vector<16xf32>
    %126 = vector.multi_reduction <add>, %125, %cst_50 [1] : vector<16x32xf32> to vector<16xf32>
    %127 = vector.shape_cast %126 : vector<16xf32> to vector<16x1xf32>
    %cst_51 = arith.constant 3.200000e+01 : f32
    %128 = vector.broadcast %cst_51 : f32 to vector<16x1xf32>
    %129 = arith.divf %127, %128 : vector<16x1xf32>
    %130 = vector.broadcast %122 : vector<16x1xf32> to vector<16x32xf32>
    %131 = arith.subf %114, %130 : vector<16x32xf32>
    %cst_52 = arith.constant 9.99999974E-6 : f32
    %132 = vector.broadcast %cst_52 : f32 to vector<16x1xf32>
    %133 = arith.addf %129, %132 : vector<16x1xf32>
    %134 = math.rsqrt %133 : vector<16x1xf32>
    %135 = vector.broadcast %134 : vector<16x1xf32> to vector<16x32xf32>
    %136 = arith.mulf %131, %135 : vector<16x32xf32>
    %137 = vector.broadcast %116 : vector<1x32xf32> to vector<16x32xf32>
    %138 = arith.mulf %136, %137 : vector<16x32xf32>
    %139 = vector.broadcast %118 : vector<1x32xf32> to vector<16x32xf32>
    %140 = arith.addf %138, %139 : vector<16x32xf32>
    %141 = arith.truncf %140 : vector<16x32xf32> to vector<16x32xbf16>
    %cst_53 = arith.constant 0.000000e+00 : f32
    %142 = vector.broadcast %cst_53 : f32 to vector<16x32xf32>
    %c0_i32_54 = arith.constant 0 : i32
    %c4_i32 = arith.constant 4 : i32
    %143 = arith.addi %c0_i32_54, %c4_i32 : i32
    %c1_i32 = arith.constant 1 : i32
    %144 = scf.for %arg22 = %c0_i32_54 to %143 step %c1_i32 iter_args(%arg23 = %142) -> (vector<16x32xf32>)  : i32 {
      %c0_74 = arith.constant 0 : index
      %180 = arith.index_cast %arg22 : i32 to index
      %c0_75 = arith.constant 0 : index
      %c0_76 = arith.constant 0 : index
      %181 = vector.load %arg11[%c0_74, %180, %c0_75, %c0_76] : memref<1x4x32x512xbf16, #tpu.memory_space<vmem>>, vector<1x1x32x512xbf16>
      %182 = vector.shape_cast %181 : vector<1x1x32x512xbf16> to vector<32x512xbf16>
      %cst_77 = arith.constant dense<0.000000e+00> : vector<16x512xf32>
      %183 = tpu.matmul %141, %182, %cst_77 {dimension_numbers = #tpu.dot_dimension_numbers<[1], [0], [0], [1], [0, 0, 1, 1], [], []>} : vector<16x32xbf16>, vector<32x512xbf16>, vector<16x512xf32> -> vector<16x512xf32>
      %c0_78 = arith.constant 0 : index
      %184 = arith.index_cast %arg22 : i32 to index
      %c0_79 = arith.constant 0 : index
      %c0_80 = arith.constant 0 : index
      %185 = vector.load %arg12[%c0_78, %184, %c0_79, %c0_80] : memref<1x4x1x512xf32, #tpu.memory_space<vmem>>, vector<1x1x1x512xf32>
      %186 = vector.shape_cast %185 : vector<1x1x1x512xf32> to vector<1x512xf32>
      %187 = vector.broadcast %186 : vector<1x512xf32> to vector<16x512xf32>
      %188 = arith.addf %183, %187 : vector<16x512xf32>
      %cst_81 = arith.constant 0.000000e+00 : f32
      %189 = vector.broadcast %cst_81 : f32 to vector<16x512xf32>
      %190 = arith.maximumf %188, %189 : vector<16x512xf32>
      %191 = arith.truncf %190 : vector<16x512xf32> to vector<16x512xbf16>
      %c0_82 = arith.constant 0 : index
      %192 = arith.index_cast %arg22 : i32 to index
      %c0_83 = arith.constant 0 : index
      %c0_84 = arith.constant 0 : index
      %193 = vector.load %arg13[%c0_82, %192, %c0_83, %c0_84] : memref<1x4x512x32xbf16, #tpu.memory_space<vmem>>, vector<1x1x512x32xbf16>
      %194 = vector.shape_cast %193 : vector<1x1x512x32xbf16> to vector<512x32xbf16>
      %cst_85 = arith.constant dense<0.000000e+00> : vector<16x32xf32>
      %195 = tpu.matmul %191, %194, %cst_85 {dimension_numbers = #tpu.dot_dimension_numbers<[1], [0], [0], [1], [0, 0, 1, 1], [], []>} : vector<16x512xbf16>, vector<512x32xbf16>, vector<16x32xf32> -> vector<16x32xf32>
      %196 = arith.addf %arg23, %195 : vector<16x32xf32>
      scf.yield %196 : vector<16x32xf32>
    }
    %c4_i32_55 = arith.constant 4 : i32
    %c0_56 = arith.constant 0 : index
    %c0_57 = arith.constant 0 : index
    %c0_58 = arith.constant 0 : index
    %145 = vector.load %arg14[%c0_56, %c0_57, %c0_58] : memref<1x1x32xf32, #tpu.memory_space<vmem>>, vector<1x1x32xf32>
    %146 = vector.shape_cast %145 : vector<1x1x32xf32> to vector<1x32xf32>
    %147 = vector.broadcast %146 : vector<1x32xf32> to vector<16x32xf32>
    %148 = arith.addf %144, %147 : vector<16x32xf32>
    %149 = arith.addf %140, %148 : vector<16x32xf32>
    %c0_59 = arith.constant 0 : index
    %c0_60 = arith.constant 0 : index
    %c0_61 = arith.constant 0 : index
    %150 = vector.load %arg15[%c0_59, %c0_60, %c0_61] : memref<1x1x32xf32, #tpu.memory_space<vmem>>, vector<1x1x32xf32>
    %151 = vector.shape_cast %150 : vector<1x1x32xf32> to vector<1x32xf32>
    %c0_62 = arith.constant 0 : index
    %c0_63 = arith.constant 0 : index
    %c0_64 = arith.constant 0 : index
    %152 = vector.load %arg16[%c0_62, %c0_63, %c0_64] : memref<1x1x32xf32, #tpu.memory_space<vmem>>, vector<1x1x32xf32>
    %153 = vector.shape_cast %152 : vector<1x1x32xf32> to vector<1x32xf32>
    %cst_65 = arith.constant dense<0.000000e+00> : vector<16xf32>
    %154 = vector.multi_reduction <add>, %149, %cst_65 [1] : vector<16x32xf32> to vector<16xf32>
    %155 = vector.shape_cast %154 : vector<16xf32> to vector<16x1xf32>
    %cst_66 = arith.constant 3.200000e+01 : f32
    %156 = vector.broadcast %cst_66 : f32 to vector<16x1xf32>
    %157 = arith.divf %155, %156 : vector<16x1xf32>
    %158 = vector.broadcast %157 : vector<16x1xf32> to vector<16x32xf32>
    %159 = arith.subf %149, %158 : vector<16x32xf32>
    %160 = arith.mulf %159, %159 : vector<16x32xf32>
    %cst_67 = arith.constant dense<0.000000e+00> : vector<16xf32>
    %161 = vector.multi_reduction <add>, %160, %cst_67 [1] : vector<16x32xf32> to vector<16xf32>
    %162 = vector.shape_cast %161 : vector<16xf32> to vector<16x1xf32>
    %cst_68 = arith.constant 3.200000e+01 : f32
    %163 = vector.broadcast %cst_68 : f32 to vector<16x1xf32>
    %164 = arith.divf %162, %163 : vector<16x1xf32>
    %165 = vector.broadcast %157 : vector<16x1xf32> to vector<16x32xf32>
    %166 = arith.subf %149, %165 : vector<16x32xf32>
    %cst_69 = arith.constant 9.99999974E-6 : f32
    %167 = vector.broadcast %cst_69 : f32 to vector<16x1xf32>
    %168 = arith.addf %164, %167 : vector<16x1xf32>
    %169 = math.rsqrt %168 : vector<16x1xf32>
    %170 = vector.broadcast %169 : vector<16x1xf32> to vector<16x32xf32>
    %171 = arith.mulf %166, %170 : vector<16x32xf32>
    %172 = vector.broadcast %151 : vector<1x32xf32> to vector<16x32xf32>
    %173 = arith.mulf %171, %172 : vector<16x32xf32>
    %174 = vector.broadcast %153 : vector<1x32xf32> to vector<16x32xf32>
    %175 = arith.addf %173, %174 : vector<16x32xf32>
    %c0_70 = arith.constant 0 : index
    %c0_71 = arith.constant 0 : index
    %176 = vector.load %arg20[%c0_70, %c0_71] : memref<16x32xf32, #tpu.memory_space<vmem>>, vector<16x32xf32>
    tpu.vector_store %arg20[%c0_70, %c0_71], %175 {strides = array<i32>} : memref<16x32xf32, #tpu.memory_space<vmem>>, vector<16x32xf32>,
    %c1_i32_72 = arith.constant 1 : i32
    %177 = arith.cmpi eq, %arg1, %c1_i32_72 : i32
    %178 = arith.extui %177 : i1 to i32
    %c0_i32_73 = arith.constant 0 : i32
    %179 = arith.cmpi ne, %178, %c0_i32_73 : i32
    scf.if %179 {
      %180 = vector.shape_cast %175 : vector<16x32xf32> to vector<2x8x32xf32>
      %cst_74 = arith.constant dense<0.000000e+00> : vector<2x32xf32>
      %181 = vector.multi_reduction <add>, %180, %cst_74 [1] : vector<2x8x32xf32> to vector<2x32xf32>
      %cst_75 = arith.constant 8.000000e+00 : f32
      %182 = vector.broadcast %cst_75 : f32 to vector<2x32xf32>
      %183 = arith.divf %181, %182 : vector<2x32xf32>
      %184 = arith.truncf %183 : vector<2x32xf32> to vector<2x32xbf16>
      %c0_76 = arith.constant 0 : index
      %c0_77 = arith.constant 0 : index
      %185 = vector.load %arg17[%c0_76, %c0_77] : memref<32x32xbf16, #tpu.memory_space<vmem>>, vector<32x32xbf16>
      %cst_78 = arith.constant dense<0.000000e+00> : vector<2x32xf32>
      %186 = tpu.matmul %184, %185, %cst_78 {dimension_numbers = #tpu.dot_dimension_numbers<[1], [0], [0], [1], [0, 0, 1, 1], [], []>} : vector<2x32xbf16>, vector<32x32xbf16>, vector<2x32xf32> -> vector<2x32xf32>
      %c0_79 = arith.constant 0 : index
      %c0_80 = arith.constant 0 : index
      %187 = vector.load %arg18[%c0_79, %c0_80] : memref<1x32xf32, #tpu.memory_space<vmem>>, vector<1x32xf32>
      %188 = vector.broadcast %187 : vector<1x32xf32> to vector<2x32xf32>
      %189 = arith.addf %186, %188 : vector<2x32xf32>
      %c0_81 = arith.constant 0 : index
      %c0_82 = arith.constant 0 : index
      %190 = vector.load %arg19[%c0_81, %c0_82] : memref<2x32xf32, #tpu.memory_space<vmem>>, vector<2x32xf32>
      tpu.vector_store %arg19[%c0_81, %c0_82], %189 {strides = array<i32>} : memref<2x32xf32, #tpu.memory_space<vmem>>, vector<2x32xf32>,
    } else {
    }
    return
  }
  func.func @transform_0(%arg0: i32, %arg1: i32) -> (i32, i32) {
    %c0_i32 = arith.constant 0 : i32
    %c0_i32_0 = arith.constant 0 : i32
    return %arg0, %c0_i32 : i32, i32
  }
  func.func @transform_1(%arg0: i32, %arg1: i32) -> (i32, i32) {
    %c0_i32 = arith.constant 0 : i32
    %c0_i32_0 = arith.constant 0 : i32
    %c0_i32_1 = arith.constant 0 : i32
    return %c0_i32, %c0_i32_0 : i32, i32
  }
  func.func @transform_2(%arg0: i32, %arg1: i32) -> (i32, i32) {
    %c0_i32 = arith.constant 0 : i32
    %c0_i32_0 = arith.constant 0 : i32
    %c0_i32_1 = arith.constant 0 : i32
    return %c0_i32, %c0_i32_0 : i32, i32
  }
  func.func @transform_3(%arg0: i32, %arg1: i32) -> (i32, i32, i32) {
    %c0_i32 = arith.constant 0 : i32
    %c0_i32_0 = arith.constant 0 : i32
    %c0_i32_1 = arith.constant 0 : i32
    return %arg1, %c0_i32, %c0_i32_0 : i32, i32, i32
  }
  func.func @transform_4(%arg0: i32, %arg1: i32) -> (i32, i32, i32) {
    %c0_i32 = arith.constant 0 : i32
    %c0_i32_0 = arith.constant 0 : i32
    %c0_i32_1 = arith.constant 0 : i32
    return %arg1, %c0_i32, %c0_i32_0 : i32, i32, i32
  }
  func.func @transform_5(%arg0: i32, %arg1: i32) -> (i32, i32, i32) {
    %c0_i32 = arith.constant 0 : i32
    %c0_i32_0 = arith.constant 0 : i32
    %c0_i32_1 = arith.constant 0 : i32
    return %arg1, %c0_i32, %c0_i32_0 : i32, i32, i32
  }
  func.func @transform_6(%arg0: i32, %arg1: i32) -> (i32, i32, i32) {
    %c0_i32 = arith.constant 0 : i32
    %c0_i32_0 = arith.constant 0 : i32
    %c0_i32_1 = arith.constant 0 : i32
    return %arg1, %c0_i32, %c0_i32_0 : i32, i32, i32
  }
  func.func @transform_7(%arg0: i32, %arg1: i32) -> (i32, i32, i32) {
    %c0_i32 = arith.constant 0 : i32
    %c0_i32_0 = arith.constant 0 : i32
    %c0_i32_1 = arith.constant 0 : i32
    return %arg1, %c0_i32, %c0_i32_0 : i32, i32, i32
  }
  func.func @transform_8(%arg0: i32, %arg1: i32) -> (i32, i32, i32) {
    %c0_i32 = arith.constant 0 : i32
    %c0_i32_0 = arith.constant 0 : i32
    %c0_i32_1 = arith.constant 0 : i32
    return %arg1, %c0_i32, %c0_i32_0 : i32, i32, i32
  }
  func.func @transform_9(%arg0: i32, %arg1: i32) -> (i32, i32, i32, i32) {
    %c0_i32 = arith.constant 0 : i32
    %c0_i32_0 = arith.constant 0 : i32
    %c0_i32_1 = arith.constant 0 : i32
    %c0_i32_2 = arith.constant 0 : i32
    return %arg1, %c0_i32, %c0_i32_0, %c0_i32_1 : i32, i32, i32, i32
  }
  func.func @transform_10(%arg0: i32, %arg1: i32) -> (i32, i32, i32, i32) {
    %c0_i32 = arith.constant 0 : i32
    %c0_i32_0 = arith.constant 0 : i32
    %c0_i32_1 = arith.constant 0 : i32
    %c0_i32_2 = arith.constant 0 : i32
    return %arg1, %c0_i32, %c0_i32_0, %c0_i32_1 : i32, i32, i32, i32
  }
  func.func @transform_11(%arg0: i32, %arg1: i32) -> (i32, i32, i32, i32) {
    %c0_i32 = arith.constant 0 : i32
    %c0_i32_0 = arith.constant 0 : i32
    %c0_i32_1 = arith.constant 0 : i32
    %c0_i32_2 = arith.constant 0 : i32
    return %arg1, %c0_i32, %c0_i32_0, %c0_i32_1 : i32, i32, i32, i32
  }
  func.func @transform_12(%arg0: i32, %arg1: i32) -> (i32, i32, i32) {
    %c0_i32 = arith.constant 0 : i32
    %c0_i32_0 = arith.constant 0 : i32
    %c0_i32_1 = arith.constant 0 : i32
    return %arg1, %c0_i32, %c0_i32_0 : i32, i32, i32
  }
  func.func @transform_13(%arg0: i32, %arg1: i32) -> (i32, i32, i32) {
    %c0_i32 = arith.constant 0 : i32
    %c0_i32_0 = arith.constant 0 : i32
    %c0_i32_1 = arith.constant 0 : i32
    return %arg1, %c0_i32, %c0_i32_0 : i32, i32, i32
  }
  func.func @transform_14(%arg0: i32, %arg1: i32) -> (i32, i32, i32) {
    %c0_i32 = arith.constant 0 : i32
    %c0_i32_0 = arith.constant 0 : i32
    %c0_i32_1 = arith.constant 0 : i32
    return %arg1, %c0_i32, %c0_i32_0 : i32, i32, i32
  }
  func.func @transform_15(%arg0: i32, %arg1: i32) -> (i32, i32) {
    %c0_i32 = arith.constant 0 : i32
    %c0_i32_0 = arith.constant 0 : i32
    %c0_i32_1 = arith.constant 0 : i32
    return %c0_i32, %c0_i32_0 : i32, i32
  }
  func.func @transform_16(%arg0: i32, %arg1: i32) -> (i32, i32) {
    %c0_i32 = arith.constant 0 : i32
    %c0_i32_0 = arith.constant 0 : i32
    %c0_i32_1 = arith.constant 0 : i32
    return %c0_i32, %c0_i32_0 : i32, i32
  }
  func.func @transform_17(%arg0: i32, %arg1: i32) -> (i32, i32) {
    %c0_i32 = arith.constant 0 : i32
    %c0_i32_0 = arith.constant 0 : i32
    return %arg0, %c0_i32 : i32, i32
  }
}

</mosaic_0001>

<llo_original>
// kernel: tpu_custom_call.1
$region0: #{tpu_custom_call.1}
  #allocation0 [shape = 'u32[]', space=smem, size = 0x4, offset = 0x4, fixed_abs, tag = 'smem constant byte address 0x4 - core index']
  #allocation1 [shape = 'u32[72,128]{1,0:T(1,128)}', space=vmem, size = 0x9000, scoped, tag = 'internal scratch']
  #allocation2 [shape = 'f32[16,32]{1,0:T(8,128)}', space=vmem, size = 0x2000, scoped, tag = 'scratch operand']
  #allocation3 [shape = 'f32[16,32]{1,0:T(8,128)}', space=vmem, size = 0x2000, scoped, tag = 'scratch operand']
  %s0 = inlined_call_operand.vmem [shape: bf16[16,16], index: 0, kind: input, shape index: {}]
  %s1 = inlined_call_operand.vmem [shape: bf16[16,32], index: 1, kind: input, shape index: {}]
  %s2 = inlined_call_operand.vmem [shape: f32[1,32], index: 2, kind: input, shape index: {}]
  %s3 = inlined_call_operand.vmem [shape: bf16[2,32,96], index: 3, kind: input, shape index: {}]
  %s4 = inlined_call_operand.vmem [shape: f32[2,1,96], index: 4, kind: input, shape index: {}]
  %s5 = inlined_call_operand.vmem [shape: bf16[2,32,32], index: 5, kind: input, shape index: {}]
  %s6 = inlined_call_operand.vmem [shape: f32[2,1,32], index: 6, kind: input, shape index: {}]
  %s7 = inlined_call_operand.vmem [shape: f32[2,1,32], index: 7, kind: input, shape index: {}]
  %s8 = inlined_call_operand.vmem [shape: f32[2,1,32], index: 8, kind: input, shape index: {}]
  %s9 = inlined_call_operand.vmem [shape: bf16[2,4,32,512], index: 9, kind: input, shape index: {}]
  %s10 = inlined_call_operand.vmem [shape: f32[2,4,1,512], index: 10, kind: input, shape index: {}]
  %s11 = inlined_call_operand.vmem [shape: bf16[2,4,512,32], index: 11, kind: input, shape index: {}]
  %s12 = inlined_call_operand.vmem [shape: f32[2,1,32], index: 12, kind: input, shape index: {}]
  %s13 = inlined_call_operand.vmem [shape: f32[2,1,32], index: 13, kind: input, shape index: {}]
  %s14 = inlined_call_operand.vmem [shape: f32[2,1,32], index: 14, kind: input, shape index: {}]
  %s15 = inlined_call_operand.vmem [shape: bf16[32,32], index: 15, kind: input, shape index: {}]
  %s16 = inlined_call_operand.vmem [shape: f32[1,32], index: 16, kind: input, shape index: {}]
  %s17 = inlined_call_operand.hbm [shape: f32[2,32], index: 17, kind: output, shape index: {}]
  %s18 = sld [smem:[#allocation0]]
  $region116: #{tpu_custom_call.1} parent=0
    _
  %s20 = ssub.s32 1, %s18
  %s21 = scalar_select 0, %s20, %s18
  $region1: #{tpu_custom_call.1} parent=0
    #allocation4 [shape = 'u8[1024]{0}', space=vmem, size = 0x400, scoped, tag = 'output window, operand 0, single buffered']
    #allocation5 [shape = 's32[2]{0}', space=sflag, size = 0x8, scoped, tag = 'scoped memory for tpu_custom_call.1']
    %22 = vsyncpa [#allocation5], 0
    loop: start=0, step=1, limit=4
    $region2: #{tpu_custom_call.1} parent=1 // loop_pre_header
      _
    $region3: #{tpu_custom_call.1} parent=1 // loop_header
      %s24 = sphi 0, %s28
      %p25 = scmp.ge.s32.totalorder %s24, 4
      %s31 = sphi 0, %s43
      %s32 = sphi 0, %s39
      %s33 = sphi 0, %s31
      %s34 = sphi 0, %s32
      %s35 = sphi 0, %s33
      %s36 = sphi 0, %s34
      %s46 = sphi 0, %s48
      %s49 = sphi 0, %s46
      %s50 = sphi 0, %s49
      %s66 = sphi 0, %s50
      %s70 = sphi 0, %s70
      %s72 = sphi 0, %s70
      %s73 = sphi 0, %s72
      %s87 = sphi 0, %s73
      %s91 = sphi 0, %s91
      %s93 = sphi 0, %s91
      %s94 = sphi 0, %s93
      %s108 = sphi 0, %s94
      %s114 = sphi 0, %s116
      %s117 = sphi 0, %s114
      %s118 = sphi 0, %s117
      %s134 = sphi 0, %s118
      %s140 = sphi 0, %s142
      %s143 = sphi 0, %s140
      %s144 = sphi 0, %s143
      %s160 = sphi 0, %s144
      %s166 = sphi 0, %s168
      %s169 = sphi 0, %s166
      %s170 = sphi 0, %s169
      %s186 = sphi 0, %s170
      %s192 = sphi 0, %s194
      %s195 = sphi 0, %s192
      %s196 = sphi 0, %s195
      %s212 = sphi 0, %s196
      %s218 = sphi 0, %s220
      %s221 = sphi 0, %s218
      %s222 = sphi 0, %s221
      %s238 = sphi 0, %s222
      %s244 = sphi 0, %s246
      %s247 = sphi 0, %s244
      %s248 = sphi 0, %s247
      %s264 = sphi 0, %s248
      %s270 = sphi 0, %s272
      %s273 = sphi 0, %s270
      %s274 = sphi 0, %s273
      %s290 = sphi 0, %s274
      %s296 = sphi 0, %s298
      %s299 = sphi 0, %s296
      %s300 = sphi 0, %s299
      %s316 = sphi 0, %s300
      %s322 = sphi 0, %s324
      %s325 = sphi 0, %s322
      %s326 = sphi 0, %s325
      %s342 = sphi 0, %s326
      %s348 = sphi 0, %s350
      %s351 = sphi 0, %s348
      %s352 = sphi 0, %s351
      %s368 = sphi 0, %s352
      %s374 = sphi 0, %s376
      %s377 = sphi 0, %s374
      %s378 = sphi 0, %s377
      %s394 = sphi 0, %s378
      %s400 = sphi 0, %s402
      %s403 = sphi 0, %s400
      %s404 = sphi 0, %s403
      %s420 = sphi 0, %s404
      %s424 = sphi 0, %s424
      %s426 = sphi 0, %s424
      %s427 = sphi 0, %s426
      %s441 = sphi 0, %s427
      %s445 = sphi 0, %s445
      %s447 = sphi 0, %s445
      %s448 = sphi 0, %s447
      %s462 = sphi 0, %s448
      %s468 = sphi 0, %s470
      %s471 = sphi 0, %s468
      %s472 = sphi 0, %s471
      %s488 = sphi 0, %s472
    $region4: #{tpu_custom_call.1} parent=1 // loop_header_branch
      %27 = sbr.rel (%p25) target = $region8
    $region5: #{tpu_custom_call.1} parent=1 // loop_body
      %s29 = ssub.s32 %s24, 1
      %s30 = ssub.s32 %s24, 2
      %s37 = sadd.s32 1, %s32
      %p38 = scmp.ge.s32.totalorder %s37, 2
      %s39 = scalar_select %p38, 0, %s37
      %s40 = sadd.s32 1, %s31
      %s41 = scalar_select %p38, %s40, %s31
      %p42 = scmp.ge.s32.totalorder %s41, 1
      %s43 = scalar_select %p42, 0, %s41
      %s44 = ssub.s32 %s31, %s43
      %p45 = scmp.eq.s32.totalorder %s44, 0
      %s47 = sadd.s32 %s46, 1
      %s48 = scalar_select %p45, %s46, %s47
      %p51 = pneg %p45
      %p52 = scmp.eq.s32.totalorder %s24, 1
      %p53 = por %p51, %p52
      %p54 = scmp.ne.s32.totalorder %s46, %s49
      %p55 = scmp.eq.s32.totalorder %s24, 0
      %p56 = por %p54, %p55
      %p57 = scmp.ne.s32.totalorder %s46, %s49
      %p58 = scmp.eq.s32.totalorder %s29, 1
      %p59 = por %p57, %p58
      %p60 = scmp.ne.s32.totalorder %s49, %s50
      %p61 = scmp.eq.s32.totalorder %s29, 0
      %p62 = por %p60, %p61
      %p63 = scmp.ne.s32.totalorder %s49, %s50
      %p64 = scmp.eq.s32.totalorder %s30, 1
      %p65 = por %p63, %p64
      %p67 = scmp.ne.s32.totalorder %s50, %s66
      %p68 = scmp.eq.s32.totalorder %s30, 0
      %p69 = por %p67, %p68
      %s71 = sadd.s32 %s70, 1
      %p74 = scmp.eq.s32.totalorder %s24, 1
      %p75 = scmp.ne.s32.totalorder %s70, %s72
      %p76 = scmp.eq.s32.totalorder %s24, 0
      %p77 = por %p75, %p76
      %p78 = scmp.ne.s32.totalorder %s70, %s72
      %p79 = scmp.eq.s32.totalorder %s29, 1
      %p80 = por %p78, %p79
      %p81 = scmp.ne.s32.totalorder %s72, %s73
      %p82 = scmp.eq.s32.totalorder %s29, 0
      %p83 = por %p81, %p82
      %p84 = scmp.ne.s32.totalorder %s72, %s73
      %p85 = scmp.eq.s32.totalorder %s30, 1
      %p86 = por %p84, %p85
      %p88 = scmp.ne.s32.totalorder %s73, %s87
      %p89 = scmp.eq.s32.totalorder %s30, 0
      %p90 = por %p88, %p89
      %s92 = sadd.s32 %s91, 1
      %p95 = scmp.eq.s32.totalorder %s24, 1
      %p96 = scmp.ne.s32.totalorder %s91, %s93
      %p97 = scmp.eq.s32.totalorder %s24, 0
      %p98 = por %p96, %p97
      %p99 = scmp.ne.s32.totalorder %s91, %s93
      %p100 = scmp.eq.s32.totalorder %s29, 1
      %p101 = por %p99, %p100
      %p102 = scmp.ne.s32.totalorder %s93, %s94
      %p103 = scmp.eq.s32.totalorder %s29, 0
      %p104 = por %p102, %p103
      %p105 = scmp.ne.s32.totalorder %s93, %s94
      %p106 = scmp.eq.s32.totalorder %s30, 1
      %p107 = por %p105, %p106
      %p109 = scmp.ne.s32.totalorder %s94, %s108
      %p110 = scmp.eq.s32.totalorder %s30, 0
      %p111 = por %p109, %p110
      %s112 = ssub.s32 %s32, %s39
      %p113 = scmp.eq.s32.totalorder %s112, 0
      %s115 = sadd.s32 %s114, 1
      %s116 = scalar_select %p113, %s114, %s115
      %p119 = pneg %p113
      %p120 = scmp.eq.s32.totalorder %s24, 1
      %p121 = por %p119, %p120
      %p122 = scmp.ne.s32.totalorder %s114, %s117
      %p123 = scmp.eq.s32.totalorder %s24, 0
      %p124 = por %p122, %p123
      %p125 = scmp.ne.s32.totalorder %s114, %s117
      %p126 = scmp.eq.s32.totalorder %s29, 1
      %p127 = por %p125, %p126
      %p128 = scmp.ne.s32.totalorder %s117, %s118
      %p129 = scmp.eq.s32.totalorder %s29, 0
      %p130 = por %p128, %p129
      %p131 = scmp.ne.s32.totalorder %s117, %s118
      %p132 = scmp.eq.s32.totalorder %s30, 1
      %p133 = por %p131, %p132
      %p135 = scmp.ne.s32.totalorder %s118, %s134
      %p136 = scmp.eq.s32.totalorder %s30, 0
      %p137 = por %p135, %p136
      %s138 = ssub.s32 %s32, %s39
      %p139 = scmp.eq.s32.totalorder %s138, 0
      %s141 = sadd.s32 %s140, 1
      %s142 = scalar_select %p139, %s140, %s141
      %p145 = pneg %p139
      %p146 = scmp.eq.s32.totalorder %s24, 1
      %p147 = por %p145, %p146
      %p148 = scmp.ne.s32.totalorder %s140, %s143
      %p149 = scmp.eq.s32.totalorder %s24, 0
      %p150 = por %p148, %p149
      %p151 = scmp.ne.s32.totalorder %s140, %s143
      %p152 = scmp.eq.s32.totalorder %s29, 1
      %p153 = por %p151, %p152
      %p154 = scmp.ne.s32.totalorder %s143, %s144
      %p155 = scmp.eq.s32.totalorder %s29, 0
      %p156 = por %p154, %p155
      %p157 = scmp.ne.s32.totalorder %s143, %s144
      %p158 = scmp.eq.s32.totalorder %s30, 1
      %p159 = por %p157, %p158
      %p161 = scmp.ne.s32.totalorder %s144, %s160
      %p162 = scmp.eq.s32.totalorder %s30, 0
      %p163 = por %p161, %p162
      %s164 = ssub.s32 %s32, %s39
      %p165 = scmp.eq.s32.totalorder %s164, 0
      %s167 = sadd.s32 %s166, 1
      %s168 = scalar_select %p165, %s166, %s167
      %p171 = pneg %p165
      %p172 = scmp.eq.s32.totalorder %s24, 1
      %p173 = por %p171, %p172
      %p174 = scmp.ne.s32.totalorder %s166, %s169
      %p175 = scmp.eq.s32.totalorder %s24, 0
      %p176 = por %p174, %p175
      %p177 = scmp.ne.s32.totalorder %s166, %s169
      %p178 = scmp.eq.s32.totalorder %s29, 1
      %p179 = por %p177, %p178
      %p180 = scmp.ne.s32.totalorder %s169, %s170
      %p181 = scmp.eq.s32.totalorder %s29, 0
      %p182 = por %p180, %p181
      %p183 = scmp.ne.s32.totalorder %s169, %s170
      %p184 = scmp.eq.s32.totalorder %s30, 1
      %p185 = por %p183, %p184
      %p187 = scmp.ne.s32.totalorder %s170, %s186
      %p188 = scmp.eq.s32.totalorder %s30, 0
      %p189 = por %p187, %p188
      %s190 = ssub.s32 %s32, %s39
      %p191 = scmp.eq.s32.totalorder %s190, 0
      %s193 = sadd.s32 %s192, 1
      %s194 = scalar_select %p191, %s192, %s193
      %p197 = pneg %p191
      %p198 = scmp.eq.s32.totalorder %s24, 1
      %p199 = por %p197, %p198
      %p200 = scmp.ne.s32.totalorder %s192, %s195
      %p201 = scmp.eq.s32.totalorder %s24, 0
      %p202 = por %p200, %p201
      %p203 = scmp.ne.s32.totalorder %s192, %s195
      %p204 = scmp.eq.s32.totalorder %s29, 1
      %p205 = por %p203, %p204
      %p206 = scmp.ne.s32.totalorder %s195, %s196
      %p207 = scmp.eq.s32.totalorder %s29, 0
      %p208 = por %p206, %p207
      %p209 = scmp.ne.s32.totalorder %s195, %s196
      %p210 = scmp.eq.s32.totalorder %s30, 1
      %p211 = por %p209, %p210
      %p213 = scmp.ne.s32.totalorder %s196, %s212
      %p214 = scmp.eq.s32.totalorder %s30, 0
      %p215 = por %p213, %p214
      %s216 = ssub.s32 %s32, %s39
      %p217 = scmp.eq.s32.totalorder %s216, 0
      %s219 = sadd.s32 %s218, 1
      %s220 = scalar_select %p217, %s218, %s219
      %p223 = pneg %p217
      %p224 = scmp.eq.s32.totalorder %s24, 1
      %p225 = por %p223, %p224
      %p226 = scmp.ne.s32.totalorder %s218, %s221
      %p227 = scmp.eq.s32.totalorder %s24, 0
      %p228 = por %p226, %p227
      %p229 = scmp.ne.s32.totalorder %s218, %s221
      %p230 = scmp.eq.s32.totalorder %s29, 1
      %p231 = por %p229, %p230
      %p232 = scmp.ne.s32.totalorder %s221, %s222
      %p233 = scmp.eq.s32.totalorder %s29, 0
      %p234 = por %p232, %p233
      %p235 = scmp.ne.s32.totalorder %s221, %s222
      %p236 = scmp.eq.s32.totalorder %s30, 1
      %p237 = por %p235, %p236
      %p239 = scmp.ne.s32.totalorder %s222, %s238
      %p240 = scmp.eq.s32.totalorder %s30, 0
      %p241 = por %p239, %p240
      %s242 = ssub.s32 %s32, %s39
      %p243 = scmp.eq.s32.totalorder %s242, 0
      %s245 = sadd.s32 %s244, 1
      %s246 = scalar_select %p243, %s244, %s245
      %p249 = pneg %p243
      %p250 = scmp.eq.s32.totalorder %s24, 1
      %p251 = por %p249, %p250
      %p252 = scmp.ne.s32.totalorder %s244, %s247
      %p253 = scmp.eq.s32.totalorder %s24, 0
      %p254 = por %p252, %p253
      %p255 = scmp.ne.s32.totalorder %s244, %s247
      %p256 = scmp.eq.s32.totalorder %s29, 1
      %p257 = por %p255, %p256
      %p258 = scmp.ne.s32.totalorder %s247, %s248
      %p259 = scmp.eq.s32.totalorder %s29, 0
      %p260 = por %p258, %p259
      %p261 = scmp.ne.s32.totalorder %s247, %s248
      %p262 = scmp.eq.s32.totalorder %s30, 1
      %p263 = por %p261, %p262
      %p265 = scmp.ne.s32.totalorder %s248, %s264
      %p266 = scmp.eq.s32.totalorder %s30, 0
      %p267 = por %p265, %p266
      %s268 = ssub.s32 %s32, %s39
      %p269 = scmp.eq.s32.totalorder %s268, 0
      %s271 = sadd.s32 %s270, 1
      %s272 = scalar_select %p269, %s270, %s271
      %p275 = pneg %p269
      %p276 = scmp.eq.s32.totalorder %s24, 1
      %p277 = por %p275, %p276
      %p278 = scmp.ne.s32.totalorder %s270, %s273
      %p279 = scmp.eq.s32.totalorder %s24, 0
      %p280 = por %p278, %p279
      %p281 = scmp.ne.s32.totalorder %s270, %s273
      %p282 = scmp.eq.s32.totalorder %s29, 1
      %p283 = por %p281, %p282
      %p284 = scmp.ne.s32.totalorder %s273, %s274
      %p285 = scmp.eq.s32.totalorder %s29, 0
      %p286 = por %p284, %p285
      %p287 = scmp.ne.s32.totalorder %s273, %s274
      %p288 = scmp.eq.s32.totalorder %s30, 1
      %p289 = por %p287, %p288
      %p291 = scmp.ne.s32.totalorder %s274, %s290
      %p292 = scmp.eq.s32.totalorder %s30, 0
      %p293 = por %p291, %p292
      %s294 = ssub.s32 %s32, %s39
      %p295 = scmp.eq.s32.totalorder %s294, 0
      %s297 = sadd.s32 %s296, 1
      %s298 = scalar_select %p295, %s296, %s297
      %p301 = pneg %p295
      %p302 = scmp.eq.s32.totalorder %s24, 1
      %p303 = por %p301, %p302
      %p304 = scmp.ne.s32.totalorder %s296, %s299
      %p305 = scmp.eq.s32.totalorder %s24, 0
      %p306 = por %p304, %p305
      %p307 = scmp.ne.s32.totalorder %s296, %s299
      %p308 = scmp.eq.s32.totalorder %s29, 1
      %p309 = por %p307, %p308
      %p310 = scmp.ne.s32.totalorder %s299, %s300
      %p311 = scmp.eq.s32.totalorder %s29, 0
      %p312 = por %p310, %p311
      %p313 = scmp.ne.s32.totalorder %s299, %s300
      %p314 = scmp.eq.s32.totalorder %s30, 1
      %p315 = por %p313, %p314
      %p317 = scmp.ne.s32.totalorder %s300, %s316
      %p318 = scmp.eq.s32.totalorder %s30, 0
      %p319 = por %p317, %p318
      %s320 = ssub.s32 %s32, %s39
      %p321 = scmp.eq.s32.totalorder %s320, 0
      %s323 = sadd.s32 %s322, 1
      %s324 = scalar_select %p321, %s322, %s323
      %p327 = pneg %p321
      %p328 = scmp.eq.s32.totalorder %s24, 1
      %p329 = por %p327, %p328
      %p330 = scmp.ne.s32.totalorder %s322, %s325
      %p331 = scmp.eq.s32.totalorder %s24, 0
      %p332 = por %p330, %p331
      %p333 = scmp.ne.s32.totalorder %s322, %s325
      %p334 = scmp.eq.s32.totalorder %s29, 1
      %p335 = por %p333, %p334
      %p336 = scmp.ne.s32.totalorder %s325, %s326
      %p337 = scmp.eq.s32.totalorder %s29, 0
      %p338 = por %p336, %p337
      %p339 = scmp.ne.s32.totalorder %s325, %s326
      %p340 = scmp.eq.s32.totalorder %s30, 1
      %p341 = por %p339, %p340
      %p343 = scmp.ne.s32.totalorder %s326, %s342
      %p344 = scmp.eq.s32.totalorder %s30, 0
      %p345 = por %p343, %p344
      %s346 = ssub.s32 %s32, %s39
      %p347 = scmp.eq.s32.totalorder %s346, 0
      %s349 = sadd.s32 %s348, 1
      %s350 = scalar_select %p347, %s348, %s349
      %p353 = pneg %p347
      %p354 = scmp.eq.s32.totalorder %s24, 1
      %p355 = por %p353, %p354
      %p356 = scmp.ne.s32.totalorder %s348, %s351
      %p357 = scmp.eq.s32.totalorder %s24, 0
      %p358 = por %p356, %p357
      %p359 = scmp.ne.s32.totalorder %s348, %s351
      %p360 = scmp.eq.s32.totalorder %s29, 1
      %p361 = por %p359, %p360
      %p362 = scmp.ne.s32.totalorder %s351, %s352
      %p363 = scmp.eq.s32.totalorder %s29, 0
      %p364 = por %p362, %p363
      %p365 = scmp.ne.s32.totalorder %s351, %s352
      %p366 = scmp.eq.s32.totalorder %s30, 1
      %p367 = por %p365, %p366
      %p369 = scmp.ne.s32.totalorder %s352, %s368
      %p370 = scmp.eq.s32.totalorder %s30, 0
      %p371 = por %p369, %p370
      %s372 = ssub.s32 %s32, %s39
      %p373 = scmp.eq.s32.totalorder %s372, 0
      %s375 = sadd.s32 %s374, 1
      %s376 = scalar_select %p373, %s374, %s375
      %p379 = pneg %p373
      %p380 = scmp.eq.s32.totalorder %s24, 1
      %p381 = por %p379, %p380
      %p382 = scmp.ne.s32.totalorder %s374, %s377
      %p383 = scmp.eq.s32.totalorder %s24, 0
      %p384 = por %p382, %p383
      %p385 = scmp.ne.s32.totalorder %s374, %s377
      %p386 = scmp.eq.s32.totalorder %s29, 1
      %p387 = por %p385, %p386
      %p388 = scmp.ne.s32.totalorder %s377, %s378
      %p389 = scmp.eq.s32.totalorder %s29, 0
      %p390 = por %p388, %p389
      %p391 = scmp.ne.s32.totalorder %s377, %s378
      %p392 = scmp.eq.s32.totalorder %s30, 1
      %p393 = por %p391, %p392
      %p395 = scmp.ne.s32.totalorder %s378, %s394
      %p396 = scmp.eq.s32.totalorder %s30, 0
      %p397 = por %p395, %p396
      %s398 = ssub.s32 %s32, %s39
      %p399 = scmp.eq.s32.totalorder %s398, 0
      %s401 = sadd.s32 %s400, 1
      %s402 = scalar_select %p399, %s400, %s401
      %p405 = pneg %p399
      %p406 = scmp.eq.s32.totalorder %s24, 1
      %p407 = por %p405, %p406
      %p408 = scmp.ne.s32.totalorder %s400, %s403
      %p409 = scmp.eq.s32.totalorder %s24, 0
      %p410 = por %p408, %p409
      %p411 = scmp.ne.s32.totalorder %s400, %s403
      %p412 = scmp.eq.s32.totalorder %s29, 1
      %p413 = por %p411, %p412
      %p414 = scmp.ne.s32.totalorder %s403, %s404
      %p415 = scmp.eq.s32.totalorder %s29, 0
      %p416 = por %p414, %p415
      %p417 = scmp.ne.s32.totalorder %s403, %s404
      %p418 = scmp.eq.s32.totalorder %s30, 1
      %p419 = por %p417, %p418
      %p421 = scmp.ne.s32.totalorder %s404, %s420
      %p422 = scmp.eq.s32.totalorder %s30, 0
      %p423 = por %p421, %p422
      %s425 = sadd.s32 %s424, 1
      %p428 = scmp.eq.s32.totalorder %s24, 1
      %p429 = scmp.ne.s32.totalorder %s424, %s426
      %p430 = scmp.eq.s32.totalorder %s24, 0
      %p431 = por %p429, %p430
      %p432 = scmp.ne.s32.totalorder %s424, %s426
      %p433 = scmp.eq.s32.totalorder %s29, 1
      %p434 = por %p432, %p433
      %p435 = scmp.ne.s32.totalorder %s426, %s427
      %p436 = scmp.eq.s32.totalorder %s29, 0
      %p437 = por %p435, %p436
      %p438 = scmp.ne.s32.totalorder %s426, %s427
      %p439 = scmp.eq.s32.totalorder %s30, 1
      %p440 = por %p438, %p439
      %p442 = scmp.ne.s32.totalorder %s427, %s441
      %p443 = scmp.eq.s32.totalorder %s30, 0
      %p444 = por %p442, %p443
      %s446 = sadd.s32 %s445, 1
      %p449 = scmp.eq.s32.totalorder %s24, 1
      %p450 = scmp.ne.s32.totalorder %s445, %s447
      %p451 = scmp.eq.s32.totalorder %s24, 0
      %p452 = por %p450, %p451
      %p453 = scmp.ne.s32.totalorder %s445, %s447
      %p454 = scmp.eq.s32.totalorder %s29, 1
      %p455 = por %p453, %p454
      %p456 = scmp.ne.s32.totalorder %s447, %s448
      %p457 = scmp.eq.s32.totalorder %s29, 0
      %p458 = por %p456, %p457
      %p459 = scmp.ne.s32.totalorder %s447, %s448
      %p460 = scmp.eq.s32.totalorder %s30, 1
      %p461 = por %p459, %p460
      %p463 = scmp.ne.s32.totalorder %s448, %s462
      %p464 = scmp.eq.s32.totalorder %s30, 0
      %p465 = por %p463, %p464
      %s466 = ssub.s32 %s31, %s43
      %p467 = scmp.eq.s32.totalorder %s466, 0
      %s469 = sadd.s32 %s468, 1
      %s470 = scalar_select %p467, %s468, %s469
      %p473 = pneg %p467
      %p474 = scmp.eq.s32.totalorder %s24, 1
      %p475 = por %p473, %p474
      %p476 = scmp.ne.s32.totalorder %s468, %s471
      %p477 = scmp.eq.s32.totalorder %s24, 0
      %p478 = por %p476, %p477
      %p479 = scmp.ne.s32.totalorder %s468, %s471
      %p480 = scmp.eq.s32.totalorder %s29, 1
      %p481 = por %p479, %p480
      %p482 = scmp.ne.s32.totalorder %s471, %s472
      %p483 = scmp.eq.s32.totalorder %s29, 0
      %p484 = por %p482, %p483
      %p485 = scmp.ne.s32.totalorder %s471, %s472
      %p486 = scmp.eq.s32.totalorder %s30, 1
      %p487 = por %p485, %p486
      %p489 = scmp.ne.s32.totalorder %s472, %s488
      %p490 = scmp.eq.s32.totalorder %s30, 0
      %p491 = por %p489, %p490
      %p492 = scmp.le.s32.totalorder 1, %s24
      %p493 = scmp.lt.s32.totalorder %s24, 3
      %p494 = pnand %p492, %p493
      %p495 = pneg %p494
      // Predicated region
      $region9: #{tpu_custom_call.1} parent=5 // pred_check
        _
      $region10: #{tpu_custom_call.1} parent=5 // pred_check_branch
        %497 = sbr.rel (%p494) target = $region12
      $region11: #{tpu_custom_call.1} parent=5 // pred_region
        %s498 = ssub.s32 %s24, 1
        // Predicated region
        $region13: #{tpu_custom_call.1} parent=11 // pred_check
          %p499 = pneg %p62
        $region14: #{tpu_custom_call.1} parent=11 // pred_check_branch
          %501 = sbr.rel (%p499) target = $region16
        $region15: #{tpu_custom_call.1} parent=11 // pred_region
          %s502 = smul.u32 2, %s33
          %p503 = scmp.lt.s32.totalorder %s502, 1
          %s504 = scalar_select %p503, %s502, 1
          %s505 = smul.addr %s504, 4
          %s506 = scalar_lea.vmem %s0, %s505
          %s507 = smul.u32 2, %s33
        $region16: #{tpu_custom_call.1} parent=11 // pred_fallthru
          _
        // Predicated region
        $region17: #{tpu_custom_call.1} parent=11 // pred_check
          %p508 = pneg %p83
        $region18: #{tpu_custom_call.1} parent=11 // pred_check_branch
          %510 = sbr.rel (%p508) target = $region20
        $region19: #{tpu_custom_call.1} parent=11 // pred_region
          _
        $region20: #{tpu_custom_call.1} parent=11 // pred_fallthru
          _
        // Predicated region
        $region21: #{tpu_custom_call.1} parent=11 // pred_check
          %p511 = pneg %p104
        $region22: #{tpu_custom_call.1} parent=11 // pred_check_branch
          %513 = sbr.rel (%p511) target = $region24
        $region23: #{tpu_custom_call.1} parent=11 // pred_region
          _
        $region24: #{tpu_custom_call.1} parent=11 // pred_fallthru
          _
        // Predicated region
        $region25: #{tpu_custom_call.1} parent=11 // pred_check
          %p514 = pneg %p437
        $region26: #{tpu_custom_call.1} parent=11 // pred_check_branch
          %516 = sbr.rel (%p514) target = $region28
        $region27: #{tpu_custom_call.1} parent=11 // pred_region
          _
        $region28: #{tpu_custom_call.1} parent=11 // pred_fallthru
          _
        // Predicated region
        $region29: #{tpu_custom_call.1} parent=11 // pred_check
          %p517 = pneg %p458
        $region30: #{tpu_custom_call.1} parent=11 // pred_check_branch
          %519 = sbr.rel (%p517) target = $region32
        $region31: #{tpu_custom_call.1} parent=11 // pred_region
          _
        $region32: #{tpu_custom_call.1} parent=11 // pred_fallthru
          _
      $region12: #{tpu_custom_call.1} parent=5 // pred_fallthru
        _
      %p520 = scmp.lt.s32.totalorder %s24, 2
      // Predicated region
      $region33: #{tpu_custom_call.1} parent=5 // pred_check
        %p521 = pneg %p520
      $region34: #{tpu_custom_call.1} parent=5 // pred_check_branch
        %523 = sbr.rel (%p521) target = $region36
      $region35: #{tpu_custom_call.1} parent=5 // pred_region
        // Predicated region
        $region37: #{tpu_custom_call.1} parent=35 // pred_check
          %p524 = pneg %p124
        $region38: #{tpu_custom_call.1} parent=35 // pred_check_branch
          %526 = sbr.rel (%p524) target = $region40
        $region39: #{tpu_custom_call.1} parent=35 // pred_region
          %p527 = scmp.lt.s32.totalorder %s32, 1
          %s528 = scalar_select %p527, %s32, 1
          %s529 = smul.addr %s528, 4
          %s530 = smul.addr %s529, 4
          %s531 = scalar_lea.vmem %s3, %s530
        $region40: #{tpu_custom_call.1} parent=35 // pred_fallthru
          _
        // Predicated region
        $region41: #{tpu_custom_call.1} parent=35 // pred_check
          %p532 = pneg %p150
        $region42: #{tpu_custom_call.1} parent=35 // pred_check_branch
          %534 = sbr.rel (%p532) target = $region44
        $region43: #{tpu_custom_call.1} parent=35 // pred_region
          %p535 = scmp.lt.s32.totalorder %s32, 1
          %s536 = scalar_select %p535, %s32, 1
          %s537 = scalar_lea.vmem %s4, %s536
        $region44: #{tpu_custom_call.1} parent=35 // pred_fallthru
          _
        // Predicated region
        $region45: #{tpu_custom_call.1} parent=35 // pred_check
          %p538 = pneg %p176
        $region46: #{tpu_custom_call.1} parent=35 // pred_check_branch
          %540 = sbr.rel (%p538) target = $region48
        $region47: #{tpu_custom_call.1} parent=35 // pred_region
          %p541 = scmp.lt.s32.totalorder %s32, 1
          %s542 = scalar_select %p541, %s32, 1
          %s543 = smul.addr %s542, 4
          %s544 = smul.addr %s543, 4
          %s545 = scalar_lea.vmem %s5, %s544
        $region48: #{tpu_custom_call.1} parent=35 // pred_fallthru
          _
        // Predicated region
        $region49: #{tpu_custom_call.1} parent=35 // pred_check
          %p546 = pneg %p202
        $region50: #{tpu_custom_call.1} parent=35 // pred_check_branch
          %548 = sbr.rel (%p546) target = $region52
        $region51: #{tpu_custom_call.1} parent=35 // pred_region
          %p549 = scmp.lt.s32.totalorder %s32, 1
          %s550 = scalar_select %p549, %s32, 1
          %s551 = scalar_lea.vmem %s6, %s550
        $region52: #{tpu_custom_call.1} parent=35 // pred_fallthru
          _
        // Predicated region
        $region53: #{tpu_custom_call.1} parent=35 // pred_check
          %p552 = pneg %p228
        $region54: #{tpu_custom_call.1} parent=35 // pred_check_branch
          %554 = sbr.rel (%p552) target = $region56
        $region55: #{tpu_custom_call.1} parent=35 // pred_region
          %p555 = scmp.lt.s32.totalorder %s32, 1
          %s556 = scalar_select %p555, %s32, 1
          %s557 = scalar_lea.vmem %s7, %s556
        $region56: #{tpu_custom_call.1} parent=35 // pred_fallthru
          _
        // Predicated region
        $region57: #{tpu_custom_call.1} parent=35 // pred_check
          %p558 = pneg %p254
        $region58: #{tpu_custom_call.1} parent=35 // pred_check_branch
          %560 = sbr.rel (%p558) target = $region60
        $region59: #{tpu_custom_call.1} parent=35 // pred_region
          %p561 = scmp.lt.s32.totalorder %s32, 1
          %s562 = scalar_select %p561, %s32, 1
          %s563 = scalar_lea.vmem %s8, %s562
        $region60: #{tpu_custom_call.1} parent=35 // pred_fallthru
          _
        // Predicated region
        $region61: #{tpu_custom_call.1} parent=35 // pred_check
          %p564 = pneg %p280
        $region62: #{tpu_custom_call.1} parent=35 // pred_check_branch
          %566 = sbr.rel (%p564) target = $region64
        $region63: #{tpu_custom_call.1} parent=35 // pred_region
          %p567 = scmp.lt.s32.totalorder %s32, 1
          %s568 = scalar_select %p567, %s32, 1
          %s569 = smul.addr %s568, 64
          %s570 = smul.addr %s569, 4
          %s571 = scalar_lea.vmem %s9, %s570
        $region64: #{tpu_custom_call.1} parent=35 // pred_fallthru
          _
        // Predicated region
        $region65: #{tpu_custom_call.1} parent=35 // pred_check
          %p572 = pneg %p306
        $region66: #{tpu_custom_call.1} parent=35 // pred_check_branch
          %574 = sbr.rel (%p572) target = $region68
        $region67: #{tpu_custom_call.1} parent=35 // pred_region
          %p575 = scmp.lt.s32.totalorder %s32, 1
          %s576 = scalar_select %p575, %s32, 1
          %s577 = smul.addr %s576, 16
          %s578 = scalar_lea.vmem %s10, %s577
        $region68: #{tpu_custom_call.1} parent=35 // pred_fallthru
          _
        // Predicated region
        $region69: #{tpu_custom_call.1} parent=35 // pred_check
          %p579 = pneg %p332
        $region70: #{tpu_custom_call.1} parent=35 // pred_check_branch
          %581 = sbr.rel (%p579) target = $region72
        $region71: #{tpu_custom_call.1} parent=35 // pred_region
          %p582 = scmp.lt.s32.totalorder %s32, 1
          %s583 = scalar_select %p582, %s32, 1
          %s584 = smul.addr %s583, 256
          %s585 = smul.addr %s584, 4
          %s586 = scalar_lea.vmem %s11, %s585
        $region72: #{tpu_custom_call.1} parent=35 // pred_fallthru
          _
        // Predicated region
        $region73: #{tpu_custom_call.1} parent=35 // pred_check
          %p587 = pneg %p358
        $region74: #{tpu_custom_call.1} parent=35 // pred_check_branch
          %589 = sbr.rel (%p587) target = $region76
        $region75: #{tpu_custom_call.1} parent=35 // pred_region
          %p590 = scmp.lt.s32.totalorder %s32, 1
          %s591 = scalar_select %p590, %s32, 1
          %s592 = scalar_lea.vmem %s12, %s591
        $region76: #{tpu_custom_call.1} parent=35 // pred_fallthru
          _
        // Predicated region
        $region77: #{tpu_custom_call.1} parent=35 // pred_check
          %p593 = pneg %p384
        $region78: #{tpu_custom_call.1} parent=35 // pred_check_branch
          %595 = sbr.rel (%p593) target = $region80
        $region79: #{tpu_custom_call.1} parent=35 // pred_region
          %p596 = scmp.lt.s32.totalorder %s32, 1
          %s597 = scalar_select %p596, %s32, 1
          %s598 = scalar_lea.vmem %s13, %s597
        $region80: #{tpu_custom_call.1} parent=35 // pred_fallthru
          _
        // Predicated region
        $region81: #{tpu_custom_call.1} parent=35 // pred_check
          %p599 = pneg %p410
        $region82: #{tpu_custom_call.1} parent=35 // pred_check_branch
          %601 = sbr.rel (%p599) target = $region84
        $region83: #{tpu_custom_call.1} parent=35 // pred_region
          %p602 = scmp.lt.s32.totalorder %s32, 1
          %s603 = scalar_select %p602, %s32, 1
          %s604 = scalar_lea.vmem %s14, %s603
        $region84: #{tpu_custom_call.1} parent=35 // pred_fallthru
          _
      $region36: #{tpu_custom_call.1} parent=5 // pred_fallthru
        _
      %p605 = scmp.le.s32.totalorder 1, %s24
      %p606 = scmp.lt.s32.totalorder %s24, 3
      %p607 = pnand %p605, %p606
      %p608 = pneg %p607
      // Predicated region
      $region85: #{tpu_custom_call.1} parent=5 // pred_check
        _
      $region86: #{tpu_custom_call.1} parent=5 // pred_check_branch
        %610 = sbr.rel (%p607) target = $region88
      $region87: #{tpu_custom_call.1} parent=5 // pred_region
        %s611 = ssub.s32 %s24, 1
        %s612 = smul.u32 2, %s33
        %p613 = scmp.lt.s32.totalorder %s612, 1
        %s614 = scalar_select %p613, %s612, 1
        %s615 = smul.addr %s614, 4
        %s616 = scalar_lea.vmem %s0, %s615
        %p617 = pneg %p62
        %p618 = pneg %p59
        %p619 = pneg %p83
        %p620 = pneg %p80
        %p621 = pneg %p104
        %p622 = pneg %p101
        %p623 = scmp.lt.s32.totalorder %s34, 1
        %s624 = scalar_select %p623, %s34, 1
        %s625 = smul.addr %s624, 4
        %s626 = smul.addr %s625, 4
        %s627 = scalar_lea.vmem %s3, %s626
        %p628 = pneg %p130
        %p629 = pneg %p127
        %p630 = scmp.lt.s32.totalorder %s34, 1
        %s631 = scalar_select %p630, %s34, 1
        %s632 = scalar_lea.vmem %s4, %s631
        %p633 = pneg %p156
        %p634 = pneg %p153
        %p635 = scmp.lt.s32.totalorder %s34, 1
        %s636 = scalar_select %p635, %s34, 1
        %s637 = smul.addr %s636, 4
        %s638 = smul.addr %s637, 4
        %s639 = scalar_lea.vmem %s5, %s638
        %p640 = pneg %p182
        %p641 = pneg %p179
        %p642 = scmp.lt.s32.totalorder %s34, 1
        %s643 = scalar_select %p642, %s34, 1
        %s644 = scalar_lea.vmem %s6, %s643
        %p645 = pneg %p208
        %p646 = pneg %p205
        %p647 = scmp.lt.s32.totalorder %s34, 1
        %s648 = scalar_select %p647, %s34, 1
        %s649 = scalar_lea.vmem %s7, %s648
        %p650 = pneg %p234
        %p651 = pneg %p231
        %p652 = scmp.lt.s32.totalorder %s34, 1
        %s653 = scalar_select %p652, %s34, 1
        %s654 = scalar_lea.vmem %s8, %s653
        %p655 = pneg %p260
        %p656 = pneg %p257
        %p657 = scmp.lt.s32.totalorder %s34, 1
        %s658 = scalar_select %p657, %s34, 1
        %s659 = smul.addr %s658, 64
        %s660 = smul.addr %s659, 4
        %s661 = scalar_lea.vmem %s9, %s660
        %p662 = pneg %p286
        %p663 = pneg %p283
        %p664 = scmp.lt.s32.totalorder %s34, 1
        %s665 = scalar_select %p664, %s34, 1
        %s666 = smul.addr %s665, 16
        %s667 = scalar_lea.vmem %s10, %s666
        %p668 = pneg %p312
        %p669 = pneg %p309
        %p670 = scmp.lt.s32.totalorder %s34, 1
        %s671 = scalar_select %p670, %s34, 1
        %s672 = smul.addr %s671, 256
        %s673 = smul.addr %s672, 4
        %s674 = scalar_lea.vmem %s11, %s673
        %p675 = pneg %p338
        %p676 = pneg %p335
        %p677 = scmp.lt.s32.totalorder %s34, 1
        %s678 = scalar_select %p677, %s34, 1
        %s679 = scalar_lea.vmem %s12, %s678
        %p680 = pneg %p364
        %p681 = pneg %p361
        %p682 = scmp.lt.s32.totalorder %s34, 1
        %s683 = scalar_select %p682, %s34, 1
        %s684 = scalar_lea.vmem %s13, %s683
        %p685 = pneg %p390
        %p686 = pneg %p387
        %p687 = scmp.lt.s32.totalorder %s34, 1
        %s688 = scalar_select %p687, %s34, 1
        %s689 = scalar_lea.vmem %s14, %s688
        %p690 = pneg %p416
        %p691 = pneg %p413
        %p692 = pneg %p437
        %p693 = pneg %p434
        %p694 = pneg %p458
        %p695 = pneg %p455
        %p696 = pneg %p484
        %p697 = pneg %p481
        %s698 = smul.u32 2, %s33
        %p699 = scmp.lt.s32.totalorder %s698, 1
        %s700 = scalar_select %p699, %s698, 1
        %s701 = smul.addr %s700, 4
        %s702 = scalar_lea.vmem %s0, %s701
        %s703 = smul.u32 2, %s33
        %p704 = scmp.lt.s32.totalorder %s34, 1
        %s705 = scalar_select %p704, %s34, 1
        %s706 = smul.addr %s705, 4
        %s707 = smul.addr %s706, 4
        %s708 = scalar_lea.vmem %s3, %s707
        %p709 = scmp.lt.s32.totalorder %s34, 1
        %s710 = scalar_select %p709, %s34, 1
        %s711 = scalar_lea.vmem %s4, %s710
        %p712 = scmp.lt.s32.totalorder %s34, 1
        %s713 = scalar_select %p712, %s34, 1
        %s714 = smul.addr %s713, 4
        %s715 = smul.addr %s714, 4
        %s716 = scalar_lea.vmem %s5, %s715
        %p717 = scmp.lt.s32.totalorder %s34, 1
        %s718 = scalar_select %p717, %s34, 1
        %s719 = scalar_lea.vmem %s6, %s718
        %p720 = scmp.lt.s32.totalorder %s34, 1
        %s721 = scalar_select %p720, %s34, 1
        %s722 = scalar_lea.vmem %s7, %s721
        %p723 = scmp.lt.s32.totalorder %s34, 1
        %s724 = scalar_select %p723, %s34, 1
        %s725 = scalar_lea.vmem %s8, %s724
        %p726 = scmp.lt.s32.totalorder %s34, 1
        %s727 = scalar_select %p726, %s34, 1
        %s728 = smul.addr %s727, 64
        %s729 = smul.addr %s728, 4
        %s730 = scalar_lea.vmem %s9, %s729
        %p731 = scmp.lt.s32.totalorder %s34, 1
        %s732 = scalar_select %p731, %s34, 1
        %s733 = smul.addr %s732, 16
        %s734 = scalar_lea.vmem %s10, %s733
        %p735 = scmp.lt.s32.totalorder %s34, 1
        %s736 = scalar_select %p735, %s34, 1
        %s737 = smul.addr %s736, 256
        %s738 = smul.addr %s737, 4
        %s739 = scalar_lea.vmem %s11, %s738
        %p740 = scmp.lt.s32.totalorder %s34, 1
        %s741 = scalar_select %p740, %s34, 1
        %s742 = scalar_lea.vmem %s12, %s741
        %p743 = scmp.lt.s32.totalorder %s34, 1
        %s744 = scalar_select %p743, %s34, 1
        %s745 = scalar_lea.vmem %s13, %s744
        %p746 = scmp.lt.s32.totalorder %s34, 1
        %s747 = scalar_select %p746, %s34, 1
        %s748 = scalar_lea.vmem %s14, %s747
        %p750 = scmp.eq.s32.totalorder %s34, 0
        // Predicated region
        $region89: #{tpu_custom_call.1} parent=87 // pred_check
          %p751 = pneg %p750
        $region90: #{tpu_custom_call.1} parent=87 // pred_check_branch
          %753 = sbr.rel (%p751) target = $region92
        $region91: #{tpu_custom_call.1} parent=87 // pred_region
          %v754 = vld [vmem:[%s702] sm:$0xf]
          %v755 = vld [vmem:[%s702 + $0x4] sm:$0xf]
          %v756 = vld [vmem:[%s1] sm:$0xf]
          %v757 = vld [vmem:[%s1 + $0x4] sm:$0xf]
          %v758 = vld [vmem:[%s2] sm:$0x1]
          %v760 = vperm.slane %v758, 0
          %v764 = vunpack.c.l.b16 %v754
          %v765 = vunpack.c.l.b16 %v755
          %v766 = vpack.c.b16 %v765, %v764
          %v769 = vunpack.c.l.b16 %v756
          %v770 = vunpack.c.l.b16 %v757
          %v771 = vpack.c.b16 %v770, %v769
          %vm773 = vcmask 130048
          %v775 = vsel %vm773, %v766, 0
          %777 = vmatpush.bf16.msra.mxu0 0
          %778 = vmatpush.bf16.msra.mxu0 0
          %779 = vmatpush.bf16.msra.mxu0 0
          %780 = vmatpush.bf16.msra.mxu0 0
          %781 = vmatpush.bf16.msra.mxu0 0
          %782 = vmatpush.bf16.msra.mxu0 0
          %783 = vmatpush.bf16.msra.mxu0 0
          %784 = vmatpush.bf16.msra.mxu0 %v771
          %785 = vmatmul.bf16.gmra.mxu0 %v775
          %v786 = vpop.f32.mrf.mxu0
          %v787 = vadd.f32 %v760, %v786
          %v788 = vpop.f32.mrf.mxu0
          %v789 = vadd.f32 %v760, %v788
          %790 = vdwg.mxu0
          %vm791 = vcmask 261120
          %792 = vst.msk [vmem:[#allocation2] sm:$0xff] %vm791, %v787
          %793 = vst.msk [vmem:[#allocation2 + $0x8] sm:$0xff] %vm791, %v789
        $region92: #{tpu_custom_call.1} parent=87 // pred_fallthru
          _
        %v794 = vld [vmem:[#allocation2] sm:$0xff]
        %v795 = vld [vmem:[#allocation2 + $0x8] sm:$0xff]
        %v796 = vpack.c.bf16 %v795, %v794
        %v797 = vld [vmem:[%s708] sm:$0xf]
        %v798 = vld [vmem:[%s708 + $0x4] sm:$0xf]
        %v799 = vld [vmem:[%s708 + $0x8] sm:$0xf]
        %v800 = vld [vmem:[%s708 + $0xc] sm:$0xf]
        %v801 = vld [vmem:[%s711] sm:$0x1]
        %v803 = vperm.slane %v801, 0
        %v809 = vunpack.c.l.b16 %v797
        %v810 = vunpack.c.l.b16 %v798
        %v811 = vunpack.c.l.b16 %v799
        %v812 = vunpack.c.l.b16 %v800
        %v813 = vpack.c.b16 %v810, %v809
        %v814 = vpack.c.b16 %v812, %v811
        %vm817 = vcmask 261120
        %v819 = vsel %vm817, %v796, 0
        %821 = vmatpush.bf16.msra.mxu0 0
        %822 = vmatpush.bf16.msra.mxu0 0
        %823 = vmatpush.bf16.msra.mxu0 0
        %824 = vmatpush.bf16.msra.mxu0 0
        %825 = vmatpush.bf16.msra.mxu0 0
        %826 = vmatpush.bf16.msra.mxu0 0
        %827 = vmatpush.bf16.msra.mxu0 %v814
        %828 = vmatpush.bf16.msra.mxu0 %v813
        %829 = vmatmul.bf16.gmra.mxu0 %v819
        %v830 = vpop.f32.mrf.mxu0
        %v831 = vadd.f32 %v803, %v830
        %v832 = vpop.f32.mrf.mxu0
        %v833 = vadd.f32 %v803, %v832
        %834 = vdwg.mxu0
        %v835 = vpack.c.bf16 %v831, %v831
        %v836 = vpack.c.bf16 %v833, %v833
        %v838 = vunpack.c.l.b16 %v835
        %v839 = vpack.c.b16 %v838, %v838
        %840 = vrot.lane.b32.xlu0 %v839, 96
        %v841 = vpop.permute.xlu0 %840
        %vm842 = vcmask 64512
        %v844 = vsel %vm842, %v835, 0
        %v847 = vsel %vm842, %v841, 0
        %849 = vmatpush.bf16.xpose.msra.mxu0 0
        %850 = vmatpush.bf16.xpose.msra.mxu0 0
        %851 = vmatpush.bf16.xpose.msra.mxu0 0
        %852 = vmatpush.bf16.xpose.msra.mxu0 0
        %853 = vmatpush.bf16.xpose.msra.mxu0 0
        %854 = vmatpush.bf16.xpose.msra.mxu0 0
        %855 = vmatpush.bf16.xpose.msra.mxu0 0
        %856 = vmatpush.bf16.xpose.msra.mxu0 %v847
        %857 = vmatmul.bf16.gmra.mxu0 %v844
        %v858 = vpop.f32.mrf.mxu0
        %v859 = vadd.f32 0.0, %v858
        %v860 = vpop.f32.mrf.mxu0
        %861 = vdwg.mxu0
        %v863 = vunpack.c.l.b16 %v836
        %v864 = vpack.c.b16 %v863, %v863
        %865 = vrot.lane.b32.xlu0 %v864, 96
        %v866 = vpop.permute.xlu0 %865
        %v868 = vsel %vm842, %v836, 0
        %v871 = vsel %vm842, %v866, 0
        %873 = vmatpush.bf16.xpose.msra.mxu0 0
        %874 = vmatpush.bf16.xpose.msra.mxu0 0
        %875 = vmatpush.bf16.xpose.msra.mxu0 0
        %876 = vmatpush.bf16.xpose.msra.mxu0 0
        %877 = vmatpush.bf16.xpose.msra.mxu0 0
        %878 = vmatpush.bf16.xpose.msra.mxu0 0
        %879 = vmatpush.bf16.xpose.msra.mxu0 0
        %880 = vmatpush.bf16.xpose.msra.mxu0 %v871
        %881 = vmatmul.bf16.gmra.mxu0 %v868
        %v882 = vpop.f32.mrf.mxu0
        %v883 = vadd.f32 0.0, %v882
        %v884 = vpop.f32.mrf.mxu0
        %885 = vdwg.mxu0
        %v886 = vmul.f32 %v859, 0.35355338
        %v887 = vmul.f32 %v883, 0.35355338
        %v888 = vsel %vm842, %v886, -inf
        %889 = vmax.xlane.f32.xlu0 %v888
        %v890 = vpop.xlane.xlu0 %889
        %v891 = vsel %vm842, %v887, -inf
        %892 = vmax.xlane.f32.xlu0 %v891
        %v893 = vpop.xlane.xlu0 %892
        %v894 = vsub.f32 %v886, %v890
        %v895 = vsub.f32 %v887, %v893
        %v896 = vmul.f32 %v894, 1.442695
        %v897 = vpow.pop %v896
        %v898 = vmul.f32 %v895, 1.442695
        %v899 = vpow.pop %v898
        %v900 = vsel %vm842, %v897, 0.0
        %901 = vadd.xlane.f32.xlu0 %v900
        %v902 = vpop.xlane.xlu0 %901
        %v903 = vsel %vm842, %v899, 0.0
        %904 = vadd.xlane.f32.xlu0 %v903
        %v905 = vpop.xlane.xlu0 %904
        %v906 = vrcp.pop %v902
        %v907 = vrcp.pop %v905
        %v908 = vmul.f32 %v897, %v906
        %v909 = vmul.f32 %v899, %v907
        %v910 = vpack.c.bf16 %v908, %v908
        %v911 = vpack.c.bf16 %v909, %v909
        %912 = vrot.lane.b32.xlu0 %v839, 64
        %v913 = vpop.permute.xlu0 %912
        %v915 = vsel %vm842, %v910, 0
        %vm917 = vcmask 1043456
        %v919 = vsel %vm917, %v913, 0
        %921 = vmatpush.bf16.msra.mxu0 0
        %922 = vmatpush.bf16.msra.mxu0 0
        %923 = vmatpush.bf16.msra.mxu0 0
        %924 = vmatpush.bf16.msra.mxu0 0
        %925 = vmatpush.bf16.msra.mxu0 0
        %926 = vmatpush.bf16.msra.mxu0 0
        %927 = vmatpush.bf16.msra.mxu0 0
        %928 = vmatpush.bf16.msra.mxu0 %v919
        %929 = vmatmul.bf16.gmra.mxu0 %v915
        %v930 = vpop.f32.mrf.mxu0
        %v931 = vadd.f32 0.0, %v930
        %v932 = vpop.f32.mrf.mxu0
        %933 = vdwg.mxu0
        %934 = vrot.lane.b32.xlu0 %v864, 64
        %v935 = vpop.permute.xlu0 %934
        %v937 = vsel %vm842, %v911, 0
        %v940 = vsel %vm917, %v935, 0
        %942 = vmatpush.bf16.msra.mxu0 0
        %943 = vmatpush.bf16.msra.mxu0 0
        %944 = vmatpush.bf16.msra.mxu0 0
        %945 = vmatpush.bf16.msra.mxu0 0
        %946 = vmatpush.bf16.msra.mxu0 0
        %947 = vmatpush.bf16.msra.mxu0 0
        %948 = vmatpush.bf16.msra.mxu0 0
        %949 = vmatpush.bf16.msra.mxu0 %v940
        %950 = vmatmul.bf16.gmra.mxu0 %v937
        %v951 = vpop.f32.mrf.mxu0
        %v952 = vadd.f32 0.0, %v951
        %v953 = vpop.f32.mrf.mxu0
        %954 = vdwg.mxu0
        %955 = vst.msk [vmem:[#allocation3] sm:$0xff] %vm842, %v931
        %956 = vst.msk [vmem:[#allocation3 + $0x8] sm:$0xff] %vm842, %v952
        %957 = vrot.lane.b32.xlu0 %v839, 120
        %v958 = vpop.permute.xlu0 %957
        %959 = vrot.lane.b32.xlu0 %v839, 88
        %v960 = vpop.permute.xlu0 %959
        %v962 = vsel %vm842, %v958, 0
        %v965 = vsel %vm842, %v960, 0
        %967 = vmatpush.bf16.xpose.msra.mxu0 0
        %968 = vmatpush.bf16.xpose.msra.mxu0 0
        %969 = vmatpush.bf16.xpose.msra.mxu0 0
        %970 = vmatpush.bf16.xpose.msra.mxu0 0
        %971 = vmatpush.bf16.xpose.msra.mxu0 0
        %972 = vmatpush.bf16.xpose.msra.mxu0 0
        %973 = vmatpush.bf16.xpose.msra.mxu0 0
        %974 = vmatpush.bf16.xpose.msra.mxu0 %v965
        %975 = vmatmul.bf16.gmra.mxu0 %v962
        %v976 = vpop.f32.mrf.mxu0
        %v977 = vadd.f32 0.0, %v976
        %v978 = vpop.f32.mrf.mxu0
        %979 = vdwg.mxu0
        %980 = vrot.lane.b32.xlu0 %v864, 120
        %v981 = vpop.permute.xlu0 %980
        %982 = vrot.lane.b32.xlu0 %v864, 88
        %v983 = vpop.permute.xlu0 %982
        %v985 = vsel %vm842, %v981, 0
        %v988 = vsel %vm842, %v983, 0
        %990 = vmatpush.bf16.xpose.msra.mxu0 0
        %991 = vmatpush.bf16.xpose.msra.mxu0 0
        %992 = vmatpush.bf16.xpose.msra.mxu0 0
        %993 = vmatpush.bf16.xpose.msra.mxu0 0
        %994 = vmatpush.bf16.xpose.msra.mxu0 0
        %995 = vmatpush.bf16.xpose.msra.mxu0 0
        %996 = vmatpush.bf16.xpose.msra.mxu0 0
        %997 = vmatpush.bf16.xpose.msra.mxu0 %v988
        %998 = vmatmul.bf16.gmra.mxu0 %v985
        %v999 = vpop.f32.mrf.mxu0
        %v1000 = vadd.f32 0.0, %v999
        %v1001 = vpop.f32.mrf.mxu0
        %1002 = vdwg.mxu0
        %v1003 = vmul.f32 %v977, 0.35355338
        %v1004 = vmul.f32 %v1000, 0.35355338
        %v1005 = vsel %vm842, %v1003, -inf
        %1006 = vmax.xlane.f32.xlu0 %v1005
        %v1007 = vpop.xlane.xlu0 %1006
        %v1008 = vsel %vm842, %v1004, -inf
        %1009 = vmax.xlane.f32.xlu0 %v1008
        %v1010 = vpop.xlane.xlu0 %1009
        %v1011 = vsub.f32 %v1003, %v1007
        %v1012 = vsub.f32 %v1004, %v1010
        %v1013 = vmul.f32 %v1011, 1.442695
        %v1014 = vpow.pop %v1013
        %v1015 = vmul.f32 %v1012, 1.442695
        %v1016 = vpow.pop %v1015
        %v1017 = vsel %vm842, %v1014, 0.0
        %1018 = vadd.xlane.f32.xlu0 %v1017
        %v1019 = vpop.xlane.xlu0 %1018
        %v1020 = vsel %vm842, %v1016, 0.0
        %1021 = vadd.xlane.f32.xlu0 %v1020
        %v1022 = vpop.xlane.xlu0 %1021
        %v1023 = vrcp.pop %v1019
        %v1024 = vrcp.pop %v1022
        %v1025 = vmul.f32 %v1014, %v1023
        %v1026 = vmul.f32 %v1016, %v1024
        %v1027 = vpack.c.bf16 %v1025, %v1025
        %v1028 = vpack.c.bf16 %v1026, %v1026
        %1029 = vrot.lane.b32.xlu0 %v839, 56
        %v1030 = vpop.permute.xlu0 %1029
        %v1032 = vsel %vm842, %v1027, 0
        %v1035 = vsel %vm917, %v1030, 0
        %1037 = vmatpush.bf16.msra.mxu0 0
        %1038 = vmatpush.bf16.msra.mxu0 0
        %1039 = vmatpush.bf16.msra.mxu0 0
        %1040 = vmatpush.bf16.msra.mxu0 0
        %1041 = vmatpush.bf16.msra.mxu0 0
        %1042 = vmatpush.bf16.msra.mxu0 0
        %1043 = vmatpush.bf16.msra.mxu0 0
        %1044 = vmatpush.bf16.msra.mxu0 %v1035
        %1045 = vmatmul.bf16.gmra.mxu0 %v1032
        %v1046 = vpop.f32.mrf.mxu0
        %v1047 = vadd.f32 0.0, %v1046
        %v1048 = vpop.f32.mrf.mxu0
        %1049 = vdwg.mxu0
        %1050 = vrot.lane.b32.xlu0 %v864, 56
        %v1051 = vpop.permute.xlu0 %1050
        %v1053 = vsel %vm842, %v1028, 0
        %v1056 = vsel %vm917, %v1051, 0
        %1058 = vmatpush.bf16.msra.mxu0 0
        %1059 = vmatpush.bf16.msra.mxu0 0
        %1060 = vmatpush.bf16.msra.mxu0 0
        %1061 = vmatpush.bf16.msra.mxu0 0
        %1062 = vmatpush.bf16.msra.mxu0 0
        %1063 = vmatpush.bf16.msra.mxu0 0
        %1064 = vmatpush.bf16.msra.mxu0 0
        %1065 = vmatpush.bf16.msra.mxu0 %v1056
        %1066 = vmatmul.bf16.gmra.mxu0 %v1053
        %v1067 = vpop.f32.mrf.mxu0
        %v1068 = vadd.f32 0.0, %v1067
        %v1069 = vpop.f32.mrf.mxu0
        %1070 = vdwg.mxu0
        %1073 = vrot.lane.b32.xlu0 %v1047, 8
        %v1074 = vpop.permute.xlu0 %1073
        %1075 = vrot.lane.b32.xlu0 %v1068, 8
        %v1076 = vpop.permute.xlu0 %1075
        %vm1079 = vcmask 130112
        %1080 = vst.msk [vmem:[#allocation3] sm:$0xff] %vm1079, %v1074
        %1081 = vst.msk [vmem:[#allocation3 + $0x8] sm:$0xff] %vm1079, %v1076
        %1082 = vrot.lane.b32.xlu0 %v839, 112
        %v1083 = vpop.permute.xlu0 %1082
        %1084 = vrot.lane.b32.xlu0 %v839, 80
        %v1085 = vpop.permute.xlu0 %1084
        %v1087 = vsel %vm842, %v1083, 0
        %v1090 = vsel %vm842, %v1085, 0
        %1092 = vmatpush.bf16.xpose.msra.mxu0 0
        %1093 = vmatpush.bf16.xpose.msra.mxu0 0
        %1094 = vmatpush.bf16.xpose.msra.mxu0 0
        %1095 = vmatpush.bf16.xpose.msra.mxu0 0
        %1096 = vmatpush.bf16.xpose.msra.mxu0 0
        %1097 = vmatpush.bf16.xpose.msra.mxu0 0
        %1098 = vmatpush.bf16.xpose.msra.mxu0 0
        %1099 = vmatpush.bf16.xpose.msra.mxu0 %v1090
        %1100 = vmatmul.bf16.gmra.mxu0 %v1087
        %v1101 = vpop.f32.mrf.mxu0
        %v1102 = vadd.f32 0.0, %v1101
        %v1103 = vpop.f32.mrf.mxu0
        %1104 = vdwg.mxu0
        %1105 = vrot.lane.b32.xlu0 %v864, 112
        %v1106 = vpop.permute.xlu0 %1105
        %1107 = vrot.lane.b32.xlu0 %v864, 80
        %v1108 = vpop.permute.xlu0 %1107
        %v1110 = vsel %vm842, %v1106, 0
        %v1113 = vsel %vm842, %v1108, 0
        %1115 = vmatpush.bf16.xpose.msra.mxu0 0
        %1116 = vmatpush.bf16.xpose.msra.mxu0 0
        %1117 = vmatpush.bf16.xpose.msra.mxu0 0
        %1118 = vmatpush.bf16.xpose.msra.mxu0 0
        %1119 = vmatpush.bf16.xpose.msra.mxu0 0
        %1120 = vmatpush.bf16.xpose.msra.mxu0 0
        %1121 = vmatpush.bf16.xpose.msra.mxu0 0
        %1122 = vmatpush.bf16.xpose.msra.mxu0 %v1113
        %1123 = vmatmul.bf16.gmra.mxu0 %v1110
        %v1124 = vpop.f32.mrf.mxu0
        %v1125 = vadd.f32 0.0, %v1124
        %v1126 = vpop.f32.mrf.mxu0
        %1127 = vdwg.mxu0
        %v1128 = vmul.f32 %v1102, 0.35355338
        %v1129 = vmul.f32 %v1125, 0.35355338
        %v1130 = vsel %vm842, %v1128, -inf
        %1131 = vmax.xlane.f32.xlu0 %v1130
        %v1132 = vpop.xlane.xlu0 %1131
        %v1133 = vsel %vm842, %v1129, -inf
        %1134 = vmax.xlane.f32.xlu0 %v1133
        %v1135 = vpop.xlane.xlu0 %1134
        %v1136 = vsub.f32 %v1128, %v1132
        %v1137 = vsub.f32 %v1129, %v1135
        %v1138 = vmul.f32 %v1136, 1.442695
        %v1139 = vpow.pop %v1138
        %v1140 = vmul.f32 %v1137, 1.442695
        %v1141 = vpow.pop %v1140
        %v1142 = vsel %vm842, %v1139, 0.0
        %1143 = vadd.xlane.f32.xlu0 %v1142
        %v1144 = vpop.xlane.xlu0 %1143
        %v1145 = vsel %vm842, %v1141, 0.0
        %1146 = vadd.xlane.f32.xlu0 %v1145
        %v1147 = vpop.xlane.xlu0 %1146
        %v1148 = vrcp.pop %v1144
        %v1149 = vrcp.pop %v1147
        %v1150 = vmul.f32 %v1139, %v1148
        %v1151 = vmul.f32 %v1141, %v1149
        %v1152 = vpack.c.bf16 %v1150, %v1150
        %v1153 = vpack.c.bf16 %v1151, %v1151
        %1154 = vrot.lane.b32.xlu0 %v839, 48
        %v1155 = vpop.permute.xlu0 %1154
        %v1157 = vsel %vm842, %v1152, 0
        %v1160 = vsel %vm917, %v1155, 0
        %1162 = vmatpush.bf16.msra.mxu0 0
        %1163 = vmatpush.bf16.msra.mxu0 0
        %1164 = vmatpush.bf16.msra.mxu0 0
        %1165 = vmatpush.bf16.msra.mxu0 0
        %1166 = vmatpush.bf16.msra.mxu0 0
        %1167 = vmatpush.bf16.msra.mxu0 0
        %1168 = vmatpush.bf16.msra.mxu0 0
        %1169 = vmatpush.bf16.msra.mxu0 %v1160
        %1170 = vmatmul.bf16.gmra.mxu0 %v1157
        %v1171 = vpop.f32.mrf.mxu0
        %v1172 = vadd.f32 0.0, %v1171
        %v1173 = vpop.f32.mrf.mxu0
        %1174 = vdwg.mxu0
        %1175 = vrot.lane.b32.xlu0 %v864, 48
        %v1176 = vpop.permute.xlu0 %1175
        %v1178 = vsel %vm842, %v1153, 0
        %v1181 = vsel %vm917, %v1176, 0
        %1183 = vmatpush.bf16.msra.mxu0 0
        %1184 = vmatpush.bf16.msra.mxu0 0
        %1185 = vmatpush.bf16.msra.mxu0 0
        %1186 = vmatpush.bf16.msra.mxu0 0
        %1187 = vmatpush.bf16.msra.mxu0 0
        %1188 = vmatpush.bf16.msra.mxu0 0
        %1189 = vmatpush.bf16.msra.mxu0 0
        %1190 = vmatpush.bf16.msra.mxu0 %v1181
        %1191 = vmatmul.bf16.gmra.mxu0 %v1178
        %v1192 = vpop.f32.mrf.mxu0
        %v1193 = vadd.f32 0.0, %v1192
        %v1194 = vpop.f32.mrf.mxu0
        %1195 = vdwg.mxu0
        %1198 = vrot.lane.b32.xlu0 %v1172, 16
        %v1199 = vpop.permute.xlu0 %1198
        %1200 = vrot.lane.b32.xlu0 %v1193, 16
        %v1201 = vpop.permute.xlu0 %1200
        %vm1204 = vcmask 195712
        %1205 = vst.msk [vmem:[#allocation3] sm:$0xff] %vm1204, %v1199
        %1206 = vst.msk [vmem:[#allocation3 + $0x8] sm:$0xff] %vm1204, %v1201
        %1207 = vrot.lane.b32.xlu0 %v839, 104
        %v1208 = vpop.permute.xlu0 %1207
        %1209 = vrot.lane.b32.xlu0 %v839, 72
        %v1210 = vpop.permute.xlu0 %1209
        %v1212 = vsel %vm842, %v1208, 0
        %v1215 = vsel %vm842, %v1210, 0
        %1217 = vmatpush.bf16.xpose.msra.mxu0 0
        %1218 = vmatpush.bf16.xpose.msra.mxu0 0
        %1219 = vmatpush.bf16.xpose.msra.mxu0 0
        %1220 = vmatpush.bf16.xpose.msra.mxu0 0
        %1221 = vmatpush.bf16.xpose.msra.mxu0 0
        %1222 = vmatpush.bf16.xpose.msra.mxu0 0
        %1223 = vmatpush.bf16.xpose.msra.mxu0 0
        %1224 = vmatpush.bf16.xpose.msra.mxu0 %v1215
        %1225 = vmatmul.bf16.gmra.mxu0 %v1212
        %v1226 = vpop.f32.mrf.mxu0
        %v1227 = vadd.f32 0.0, %v1226
        %v1228 = vpop.f32.mrf.mxu0
        %1229 = vdwg.mxu0
        %1230 = vrot.lane.b32.xlu0 %v864, 104
        %v1231 = vpop.permute.xlu0 %1230
        %1232 = vrot.lane.b32.xlu0 %v864, 72
        %v1233 = vpop.permute.xlu0 %1232
        %v1235 = vsel %vm842, %v1231, 0
        %v1238 = vsel %vm842, %v1233, 0
        %1240 = vmatpush.bf16.xpose.msra.mxu0 0
        %1241 = vmatpush.bf16.xpose.msra.mxu0 0
        %1242 = vmatpush.bf16.xpose.msra.mxu0 0
        %1243 = vmatpush.bf16.xpose.msra.mxu0 0
        %1244 = vmatpush.bf16.xpose.msra.mxu0 0
        %1245 = vmatpush.bf16.xpose.msra.mxu0 0
        %1246 = vmatpush.bf16.xpose.msra.mxu0 0
        %1247 = vmatpush.bf16.xpose.msra.mxu0 %v1238
        %1248 = vmatmul.bf16.gmra.mxu0 %v1235
        %v1249 = vpop.f32.mrf.mxu0
        %v1250 = vadd.f32 0.0, %v1249
        %v1251 = vpop.f32.mrf.mxu0
        %1252 = vdwg.mxu0
        %v1253 = vmul.f32 %v1227, 0.35355338
        %v1254 = vmul.f32 %v1250, 0.35355338
        %v1255 = vsel %vm842, %v1253, -inf
        %1256 = vmax.xlane.f32.xlu0 %v1255
        %v1257 = vpop.xlane.xlu0 %1256
        %v1258 = vsel %vm842, %v1254, -inf
        %1259 = vmax.xlane.f32.xlu0 %v1258
        %v1260 = vpop.xlane.xlu0 %1259
        %v1261 = vsub.f32 %v1253, %v1257
        %v1262 = vsub.f32 %v1254, %v1260
        %v1263 = vmul.f32 %v1261, 1.442695
        %v1264 = vpow.pop %v1263
        %v1265 = vmul.f32 %v1262, 1.442695
        %v1266 = vpow.pop %v1265
        %v1267 = vsel %vm842, %v1264, 0.0
        %1268 = vadd.xlane.f32.xlu0 %v1267
        %v1269 = vpop.xlane.xlu0 %1268
        %v1270 = vsel %vm842, %v1266, 0.0
        %1271 = vadd.xlane.f32.xlu0 %v1270
        %v1272 = vpop.xlane.xlu0 %1271
        %v1273 = vrcp.pop %v1269
        %v1274 = vrcp.pop %v1272
        %v1275 = vmul.f32 %v1264, %v1273
        %v1276 = vmul.f32 %v1266, %v1274
        %v1277 = vpack.c.bf16 %v1275, %v1275
        %v1278 = vpack.c.bf16 %v1276, %v1276
        %1279 = vrot.lane.b32.xlu0 %v839, 40
        %v1280 = vpop.permute.xlu0 %1279
        %v1282 = vsel %vm842, %v1277, 0
        %v1285 = vsel %vm917, %v1280, 0
        %1287 = vmatpush.bf16.msra.mxu0 0
        %1288 = vmatpush.bf16.msra.mxu0 0
        %1289 = vmatpush.bf16.msra.mxu0 0
        %1290 = vmatpush.bf16.msra.mxu0 0
        %1291 = vmatpush.bf16.msra.mxu0 0
        %1292 = vmatpush.bf16.msra.mxu0 0
        %1293 = vmatpush.bf16.msra.mxu0 0
        %1294 = vmatpush.bf16.msra.mxu0 %v1285
        %1295 = vmatmul.bf16.gmra.mxu0 %v1282
        %v1296 = vpop.f32.mrf.mxu0
        %v1297 = vadd.f32 0.0, %v1296
        %v1298 = vpop.f32.mrf.mxu0
        %1299 = vdwg.mxu0
        %1300 = vrot.lane.b32.xlu0 %v864, 40
        %v1301 = vpop.permute.xlu0 %1300
        %v1303 = vsel %vm842, %v1278, 0
        %v1306 = vsel %vm917, %v1301, 0
        %1308 = vmatpush.bf16.msra.mxu0 0
        %1309 = vmatpush.bf16.msra.mxu0 0
        %1310 = vmatpush.bf16.msra.mxu0 0
        %1311 = vmatpush.bf16.msra.mxu0 0
        %1312 = vmatpush.bf16.msra.mxu0 0
        %1313 = vmatpush.bf16.msra.mxu0 0
        %1314 = vmatpush.bf16.msra.mxu0 0
        %1315 = vmatpush.bf16.msra.mxu0 %v1306
        %1316 = vmatmul.bf16.gmra.mxu0 %v1303
        %v1317 = vpop.f32.mrf.mxu0
        %v1318 = vadd.f32 0.0, %v1317
        %v1319 = vpop.f32.mrf.mxu0
        %1320 = vdwg.mxu0
        %1323 = vrot.lane.b32.xlu0 %v1297, 24
        %v1324 = vpop.permute.xlu0 %1323
        %1325 = vrot.lane.b32.xlu0 %v1318, 24
        %v1326 = vpop.permute.xlu0 %1325
        %vm1329 = vcmask 261312
        %1330 = vst.msk [vmem:[#allocation3] sm:$0xff] %vm1329, %v1324
        %1331 = vst.msk [vmem:[#allocation3 + $0x8] sm:$0xff] %vm1329, %v1326
        %v1332 = vld [vmem:[#allocation3] sm:$0xff]
        %v1333 = vld [vmem:[#allocation3 + $0x8] sm:$0xff]
        %v1334 = vpack.c.bf16 %v1333, %v1332
        %v1335 = vld [vmem:[%s716] sm:$0xf]
        %v1336 = vld [vmem:[%s716 + $0x4] sm:$0xf]
        %v1337 = vld [vmem:[%s716 + $0x8] sm:$0xf]
        %v1338 = vld [vmem:[%s716 + $0xc] sm:$0xf]
        %v1339 = vld [vmem:[%s719] sm:$0x1]
        %v1341 = vperm.slane %v1339, 0
        %v1347 = vunpack.c.l.b16 %v1335
        %v1348 = vunpack.c.l.b16 %v1336
        %v1349 = vunpack.c.l.b16 %v1337
        %v1350 = vunpack.c.l.b16 %v1338
        %v1351 = vpack.c.b16 %v1348, %v1347
        %v1352 = vpack.c.b16 %v1350, %v1349
        %v1356 = vsel %vm817, %v1334, 0
        %1358 = vmatpush.bf16.msra.mxu0 0
        %1359 = vmatpush.bf16.msra.mxu0 0
        %1360 = vmatpush.bf16.msra.mxu0 0
        %1361 = vmatpush.bf16.msra.mxu0 0
        %1362 = vmatpush.bf16.msra.mxu0 0
        %1363 = vmatpush.bf16.msra.mxu0 0
        %1364 = vmatpush.bf16.msra.mxu0 %v1352
        %1365 = vmatpush.bf16.msra.mxu0 %v1351
        %1366 = vmatmul.bf16.gmra.mxu0 %v1356
        %v1367 = vpop.f32.mrf.mxu0
        %v1368 = vadd.f32 %v1341, %v1367
        %v1369 = vpop.f32.mrf.mxu0
        %v1370 = vadd.f32 %v1341, %v1369
        %1371 = vdwg.mxu0
        %v1372 = vadd.f32 %v794, %v1368
        %v1373 = vadd.f32 %v795, %v1370
        %v1374 = vld [vmem:[%s722] sm:$0x1]
        %v1375 = vld [vmem:[%s725] sm:$0x1]
        %v1376 = vsel %vm817, %v1372, 0.0
        %1377 = vadd.xlane.f32.xlu0 %v1376
        %v1378 = vpop.xlane.xlu0 %1377
        %v1379 = vsel %vm817, %v1373, 0.0
        %1380 = vadd.xlane.f32.xlu0 %v1379
        %v1381 = vpop.xlane.xlu0 %1380
        %v1382 = vrcp.pop 32.0
        %v1383 = vmul.f32 32.0, %v1382
        %v1384 = vsub.f32 1.0, %v1383
        %v1385 = vmul.f32 %v1382, %v1384
        %v1386 = vadd.f32 %v1382, %v1385
        %vm1387 = vweird.f32 %v1382
        %v1388 = vsel %vm1387, %v1382, %v1386
        %v1389 = vmul.f32 %v1378, %v1388
        %v1390 = vmul.f32 %v1381, %v1388
        %v1391 = vsub.f32 %v1372, %v1389
        %v1392 = vsub.f32 %v1373, %v1390
        %v1393 = vmul.f32 %v1391, %v1391
        %v1394 = vmul.f32 %v1392, %v1392
        %v1395 = vsel %vm817, %v1393, 0.0
        %1396 = vadd.xlane.f32.xlu0 %v1395
        %v1397 = vpop.xlane.xlu0 %1396
        %v1398 = vsel %vm817, %v1394, 0.0
        %1399 = vadd.xlane.f32.xlu0 %v1398
        %v1400 = vpop.xlane.xlu0 %1399
        %v1401 = vmul.f32 %v1397, %v1388
        %v1402 = vmul.f32 %v1400, %v1388
        %v1403 = vadd.f32 %v1401, 1e-05
        %v1404 = vadd.f32 %v1402, 1e-05
        %v1405 = vrsqrt.pop %v1403
        %v1406 = vmul.f32 %v1405, %v1403
        %v1407 = vmul.f32 %v1406, %v1405
        %v1408 = vmul.f32 0.5, %v1407
        %v1409 = vsub.f32 1.5, %v1408
        %v1410 = vmul.f32 %v1405, %v1409
        %vm1411 = vweird.f32 %v1403
        %vm1412 = vweird.f32 %v1405
        %vm1413 = vmor %vm1411, %vm1412
        %v1414 = vsel %vm1413, %v1405, %v1410
        %v1415 = vrsqrt.pop %v1404
        %v1416 = vmul.f32 %v1415, %v1404
        %v1417 = vmul.f32 %v1416, %v1415
        %v1418 = vmul.f32 0.5, %v1417
        %v1419 = vsub.f32 1.5, %v1418
        %v1420 = vmul.f32 %v1415, %v1419
        %vm1421 = vweird.f32 %v1404
        %vm1422 = vweird.f32 %v1415
        %vm1423 = vmor %vm1421, %vm1422
        %v1424 = vsel %vm1423, %v1415, %v1420
        %v1425 = vmul.f32 %v1391, %v1414
        %v1426 = vmul.f32 %v1392, %v1424
        %v1428 = vperm.slane %v1374, 0
        %v1430 = vmul.f32 %v1425, %v1428
        %v1431 = vmul.f32 %v1426, %v1428
        %v1433 = vperm.slane %v1375, 0
        %v1435 = vadd.f32 %v1430, %v1433
        %v1436 = vadd.f32 %v1431, %v1433
        %v1437 = vpack.c.bf16 %v1436, %v1435
        loop: start=0, step=1, limit=4
        $region93: #{tpu_custom_call.1} parent=87 // loop_pre_header
          _
        $region94: #{tpu_custom_call.1} parent=87 // loop_header
          %s1439 = sphi 0, %s1443
          %p1440 = scmp.ge.s32.totalorder %s1439, 4
          %v1444 = vphi 0.0, %v1895
          %v1445 = vphi 0.0, %v1896
        $region95: #{tpu_custom_call.1} parent=87 // loop_header_branch
          %1442 = sbr.rel (%p1440) target = $region99
        $region96: #{tpu_custom_call.1} parent=87 // loop_body
          %s1446 = smul.u32 %s1439, 16
          %s1447 = smul.addr %s1446, 4
          %s1448 = scalar_lea.vmem %s730, %s1447
          %v1449 = vld [vmem:[%s1448] sm:$0xff]
          %v1450 = vld [vmem:[%s1448 + $0x8] sm:$0xff]
          %v1451 = vld [vmem:[%s1448 + $0x10] sm:$0xff]
          %v1452 = vld [vmem:[%s1448 + $0x18] sm:$0xff]
          %v1453 = vld [vmem:[%s1448 + $0x20] sm:$0xff]
          %v1454 = vld [vmem:[%s1448 + $0x28] sm:$0xff]
          %v1455 = vld [vmem:[%s1448 + $0x30] sm:$0xff]
          %v1456 = vld [vmem:[%s1448 + $0x38] sm:$0xff]
          %s1457 = smul.u32 %s1439, 4
          %s1458 = scalar_lea.vmem %s734, %s1457
          %v1459 = vld [vmem:[%s1458] sm:$0xf]
          %v1461 = vperm.slane %v1459, 0
          %v1462 = vperm.slane %v1459, 1
          %v1463 = vperm.slane %v1459, 2
          %v1464 = vperm.slane %v1459, 3
          %v1477 = vunpack.c.l.b16 %v1449
          %v1478 = vunpack.c.h.b16 %v1449
          %v1479 = vunpack.c.l.b16 %v1450
          %v1480 = vunpack.c.h.b16 %v1450
          %v1481 = vunpack.c.l.b16 %v1451
          %v1482 = vunpack.c.h.b16 %v1451
          %v1483 = vunpack.c.l.b16 %v1452
          %v1484 = vunpack.c.h.b16 %v1452
          %v1485 = vunpack.c.l.b16 %v1453
          %v1486 = vunpack.c.h.b16 %v1453
          %v1487 = vunpack.c.l.b16 %v1454
          %v1488 = vunpack.c.h.b16 %v1454
          %v1489 = vunpack.c.l.b16 %v1455
          %v1490 = vunpack.c.h.b16 %v1455
          %v1491 = vunpack.c.l.b16 %v1456
          %v1492 = vunpack.c.h.b16 %v1456
          %v1493 = vpack.c.b16 %v1481, %v1477
          %v1494 = vpack.c.b16 %v1482, %v1478
          %v1495 = vpack.c.b16 %v1483, %v1479
          %v1496 = vpack.c.b16 %v1484, %v1480
          %v1497 = vpack.c.b16 %v1489, %v1485
          %v1498 = vpack.c.b16 %v1490, %v1486
          %v1499 = vpack.c.b16 %v1491, %v1487
          %v1500 = vpack.c.b16 %v1492, %v1488
          %v1510 = vsel %vm817, %v1437, 0
          %1512 = vmatpush.bf16.msra.mxu0 0
          %1513 = vmatpush.bf16.msra.mxu0 0
          %1514 = vmatpush.bf16.msra.mxu0 0
          %1515 = vmatpush.bf16.msra.mxu0 0
          %1516 = vmatpush.bf16.msra.mxu0 0
          %1517 = vmatpush.bf16.msra.mxu0 0
          %1518 = vmatpush.bf16.msra.mxu0 %v1497
          %1519 = vmatpush.bf16.msra.mxu0 %v1493
          %1520 = vmatmul.bf16.gmra.mxu0 %v1510
          %v1521 = vpop.f32.mrf.mxu0
          %v1522 = vadd.f32 %v1461, %v1521
          %v1523 = vpop.f32.mrf.mxu0
          %v1524 = vadd.f32 %v1461, %v1523
          %1525 = vdwg.mxu0
          %1526 = vmatpush.bf16.msra.mxu0 0
          %1527 = vmatpush.bf16.msra.mxu0 0
          %1528 = vmatpush.bf16.msra.mxu0 0
          %1529 = vmatpush.bf16.msra.mxu0 0
          %1530 = vmatpush.bf16.msra.mxu0 0
          %1531 = vmatpush.bf16.msra.mxu0 0
          %1532 = vmatpush.bf16.msra.mxu0 %v1498
          %1533 = vmatpush.bf16.msra.mxu0 %v1494
          %1534 = vmatmul.bf16.gmra.mxu0 %v1510
          %v1535 = vpop.f32.mrf.mxu0
          %v1536 = vadd.f32 %v1462, %v1535
          %v1537 = vpop.f32.mrf.mxu0
          %v1538 = vadd.f32 %v1462, %v1537
          %1539 = vdwg.mxu0
          %1540 = vmatpush.bf16.msra.mxu0 0
          %1541 = vmatpush.bf16.msra.mxu0 0
          %1542 = vmatpush.bf16.msra.mxu0 0
          %1543 = vmatpush.bf16.msra.mxu0 0
          %1544 = vmatpush.bf16.msra.mxu0 0
          %1545 = vmatpush.bf16.msra.mxu0 0
          %1546 = vmatpush.bf16.msra.mxu0 %v1499
          %1547 = vmatpush.bf16.msra.mxu0 %v1495
          %1548 = vmatmul.bf16.gmra.mxu0 %v1510
          %v1549 = vpop.f32.mrf.mxu0
          %v1550 = vadd.f32 %v1463, %v1549
          %v1551 = vpop.f32.mrf.mxu0
          %v1552 = vadd.f32 %v1463, %v1551
          %1553 = vdwg.mxu0
          %1554 = vmatpush.bf16.msra.mxu0 0
          %1555 = vmatpush.bf16.msra.mxu0 0
          %1556 = vmatpush.bf16.msra.mxu0 0
          %1557 = vmatpush.bf16.msra.mxu0 0
          %1558 = vmatpush.bf16.msra.mxu0 0
          %1559 = vmatpush.bf16.msra.mxu0 0
          %1560 = vmatpush.bf16.msra.mxu0 %v1500
          %1561 = vmatpush.bf16.msra.mxu0 %v1496
          %1562 = vmatmul.bf16.gmra.mxu0 %v1510
          %v1563 = vpop.f32.mrf.mxu0
          %v1564 = vadd.f32 %v1464, %v1563
          %v1565 = vpop.f32.mrf.mxu0
          %v1566 = vadd.f32 %v1464, %v1565
          %1567 = vdwg.mxu0
          %v1568 = vmax.f32 %v1522, 0.0
          %v1569 = vmax.f32 %v1536, 0.0
          %v1570 = vmax.f32 %v1550, 0.0
          %v1571 = vmax.f32 %v1564, 0.0
          %v1572 = vmax.f32 %v1524, 0.0
          %v1573 = vmax.f32 %v1538, 0.0
          %v1574 = vmax.f32 %v1552, 0.0
          %v1575 = vmax.f32 %v1566, 0.0
          %v1576 = vpack.c.bf16 %v1572, %v1568
          %v1577 = vpack.c.bf16 %v1573, %v1569
          %v1578 = vpack.c.bf16 %v1574, %v1570
          %v1579 = vpack.c.bf16 %v1575, %v1571
          %s1580 = smul.u32 %s1439, 64
          %s1581 = smul.addr %s1580, 4
          %s1582 = scalar_lea.vmem %s739, %s1581
          %v1583 = vld [vmem:[%s1582] sm:$0xf]
          %v1584 = vld [vmem:[%s1582 + $0x4] sm:$0xf]
          %v1585 = vld [vmem:[%s1582 + $0x8] sm:$0xf]
          %v1586 = vld [vmem:[%s1582 + $0xc] sm:$0xf]
          %v1587 = vld [vmem:[%s1582 + $0x10] sm:$0xf]
          %v1588 = vld [vmem:[%s1582 + $0x14] sm:$0xf]
          %v1589 = vld [vmem:[%s1582 + $0x18] sm:$0xf]
          %v1590 = vld [vmem:[%s1582 + $0x1c] sm:$0xf]
          %v1591 = vld [vmem:[%s1582 + $0x20] sm:$0xf]
          %v1592 = vld [vmem:[%s1582 + $0x24] sm:$0xf]
          %v1593 = vld [vmem:[%s1582 + $0x28] sm:$0xf]
          %v1594 = vld [vmem:[%s1582 + $0x2c] sm:$0xf]
          %v1595 = vld [vmem:[%s1582 + $0x30] sm:$0xf]
          %v1596 = vld [vmem:[%s1582 + $0x34] sm:$0xf]
          %v1597 = vld [vmem:[%s1582 + $0x38] sm:$0xf]
          %v1598 = vld [vmem:[%s1582 + $0x3c] sm:$0xf]
          %v1599 = vld [vmem:[%s1582 + $0x40] sm:$0xf]
          %v1600 = vld [vmem:[%s1582 + $0x44] sm:$0xf]
          %v1601 = vld [vmem:[%s1582 + $0x48] sm:$0xf]
          %v1602 = vld [vmem:[%s1582 + $0x4c] sm:$0xf]
          %v1603 = vld [vmem:[%s1582 + $0x50] sm:$0xf]
          %v1604 = vld [vmem:[%s1582 + $0x54] sm:$0xf]
          %v1605 = vld [vmem:[%s1582 + $0x58] sm:$0xf]
          %v1606 = vld [vmem:[%s1582 + $0x5c] sm:$0xf]
          %v1607 = vld [vmem:[%s1582 + $0x60] sm:$0xf]
          %v1608 = vld [vmem:[%s1582 + $0x64] sm:$0xf]
          %v1609 = vld [vmem:[%s1582 + $0x68] sm:$0xf]
          %v1610 = vld [vmem:[%s1582 + $0x6c] sm:$0xf]
          %v1611 = vld [vmem:[%s1582 + $0x70] sm:$0xf]
          %v1612 = vld [vmem:[%s1582 + $0x74] sm:$0xf]
          %v1613 = vld [vmem:[%s1582 + $0x78] sm:$0xf]
          %v1614 = vld [vmem:[%s1582 + $0x7c] sm:$0xf]
          %v1615 = vld [vmem:[%s1582 + $0x80] sm:$0xf]
          %v1616 = vld [vmem:[%s1582 + $0x84] sm:$0xf]
          %v1617 = vld [vmem:[%s1582 + $0x88] sm:$0xf]
          %v1618 = vld [vmem:[%s1582 + $0x8c] sm:$0xf]
          %v1619 = vld [vmem:[%s1582 + $0x90] sm:$0xf]
          %v1620 = vld [vmem:[%s1582 + $0x94] sm:$0xf]
          %v1621 = vld [vmem:[%s1582 + $0x98] sm:$0xf]
          %v1622 = vld [vmem:[%s1582 + $0x9c] sm:$0xf]
          %v1623 = vld [vmem:[%s1582 + $0xa0] sm:$0xf]
          %v1624 = vld [vmem:[%s1582 + $0xa4] sm:$0xf]
          %v1625 = vld [vmem:[%s1582 + $0xa8] sm:$0xf]
          %v1626 = vld [vmem:[%s1582 + $0xac] sm:$0xf]
          %v1627 = vld [vmem:[%s1582 + $0xb0] sm:$0xf]
          %v1628 = vld [vmem:[%s1582 + $0xb4] sm:$0xf]
          %v1629 = vld [vmem:[%s1582 + $0xb8] sm:$0xf]
          %v1630 = vld [vmem:[%s1582 + $0xbc] sm:$0xf]
          %v1631 = vld [vmem:[%s1582 + $0xc0] sm:$0xf]
          %v1632 = vld [vmem:[%s1582 + $0xc4] sm:$0xf]
          %v1633 = vld [vmem:[%s1582 + $0xc8] sm:$0xf]
          %v1634 = vld [vmem:[%s1582 + $0xcc] sm:$0xf]
          %v1635 = vld [vmem:[%s1582 + $0xd0] sm:$0xf]
          %v1636 = vld [vmem:[%s1582 + $0xd4] sm:$0xf]
          %v1637 = vld [vmem:[%s1582 + $0xd8] sm:$0xf]
          %v1638 = vld [vmem:[%s1582 + $0xdc] sm:$0xf]
          %v1639 = vld [vmem:[%s1582 + $0xe0] sm:$0xf]
          %v1640 = vld [vmem:[%s1582 + $0xe4] sm:$0xf]
          %v1641 = vld [vmem:[%s1582 + $0xe8] sm:$0xf]
          %v1642 = vld [vmem:[%s1582 + $0xec] sm:$0xf]
          %v1643 = vld [vmem:[%s1582 + $0xf0] sm:$0xf]
          %v1644 = vld [vmem:[%s1582 + $0xf4] sm:$0xf]
          %v1645 = vld [vmem:[%s1582 + $0xf8] sm:$0xf]
          %v1646 = vld [vmem:[%s1582 + $0xfc] sm:$0xf]
          %v1711 = vunpack.c.l.b16 %v1583
          %v1712 = vunpack.c.l.b16 %v1584
          %v1713 = vunpack.c.l.b16 %v1585
          %v1714 = vunpack.c.l.b16 %v1586
          %v1715 = vunpack.c.l.b16 %v1587
          %v1716 = vunpack.c.l.b16 %v1588
          %v1717 = vunpack.c.l.b16 %v1589
          %v1718 = vunpack.c.l.b16 %v1590
          %v1719 = vunpack.c.l.b16 %v1591
          %v1720 = vunpack.c.l.b16 %v1592
          %v1721 = vunpack.c.l.b16 %v1593
          %v1722 = vunpack.c.l.b16 %v1594
          %v1723 = vunpack.c.l.b16 %v1595
          %v1724 = vunpack.c.l.b16 %v1596
          %v1725 = vunpack.c.l.b16 %v1597
          %v1726 = vunpack.c.l.b16 %v1598
          %v1727 = vunpack.c.l.b16 %v1599
          %v1728 = vunpack.c.l.b16 %v1600
          %v1729 = vunpack.c.l.b16 %v1601
          %v1730 = vunpack.c.l.b16 %v1602
          %v1731 = vunpack.c.l.b16 %v1603
          %v1732 = vunpack.c.l.b16 %v1604
          %v1733 = vunpack.c.l.b16 %v1605
          %v1734 = vunpack.c.l.b16 %v1606
          %v1735 = vunpack.c.l.b16 %v1607
          %v1736 = vunpack.c.l.b16 %v1608
          %v1737 = vunpack.c.l.b16 %v1609
          %v1738 = vunpack.c.l.b16 %v1610
          %v1739 = vunpack.c.l.b16 %v1611
          %v1740 = vunpack.c.l.b16 %v1612
          %v1741 = vunpack.c.l.b16 %v1613
          %v1742 = vunpack.c.l.b16 %v1614
          %v1743 = vunpack.c.l.b16 %v1615
          %v1744 = vunpack.c.l.b16 %v1616
          %v1745 = vunpack.c.l.b16 %v1617
          %v1746 = vunpack.c.l.b16 %v1618
          %v1747 = vunpack.c.l.b16 %v1619
          %v1748 = vunpack.c.l.b16 %v1620
          %v1749 = vunpack.c.l.b16 %v1621
          %v1750 = vunpack.c.l.b16 %v1622
          %v1751 = vunpack.c.l.b16 %v1623
          %v1752 = vunpack.c.l.b16 %v1624
          %v1753 = vunpack.c.l.b16 %v1625
          %v1754 = vunpack.c.l.b16 %v1626
          %v1755 = vunpack.c.l.b16 %v1627
          %v1756 = vunpack.c.l.b16 %v1628
          %v1757 = vunpack.c.l.b16 %v1629
          %v1758 = vunpack.c.l.b16 %v1630
          %v1759 = vunpack.c.l.b16 %v1631
          %v1760 = vunpack.c.l.b16 %v1632
          %v1761 = vunpack.c.l.b16 %v1633
          %v1762 = vunpack.c.l.b16 %v1634
          %v1763 = vunpack.c.l.b16 %v1635
          %v1764 = vunpack.c.l.b16 %v1636
          %v1765 = vunpack.c.l.b16 %v1637
          %v1766 = vunpack.c.l.b16 %v1638
          %v1767 = vunpack.c.l.b16 %v1639
          %v1768 = vunpack.c.l.b16 %v1640
          %v1769 = vunpack.c.l.b16 %v1641
          %v1770 = vunpack.c.l.b16 %v1642
          %v1771 = vunpack.c.l.b16 %v1643
          %v1772 = vunpack.c.l.b16 %v1644
          %v1773 = vunpack.c.l.b16 %v1645
          %v1774 = vunpack.c.l.b16 %v1646
          %v1775 = vpack.c.b16 %v1712, %v1711
          %v1776 = vpack.c.b16 %v1714, %v1713
          %v1777 = vpack.c.b16 %v1716, %v1715
          %v1778 = vpack.c.b16 %v1718, %v1717
          %v1779 = vpack.c.b16 %v1720, %v1719
          %v1780 = vpack.c.b16 %v1722, %v1721
          %v1781 = vpack.c.b16 %v1724, %v1723
          %v1782 = vpack.c.b16 %v1726, %v1725
          %v1783 = vpack.c.b16 %v1728, %v1727
          %v1784 = vpack.c.b16 %v1730, %v1729
          %v1785 = vpack.c.b16 %v1732, %v1731
          %v1786 = vpack.c.b16 %v1734, %v1733
          %v1787 = vpack.c.b16 %v1736, %v1735
          %v1788 = vpack.c.b16 %v1738, %v1737
          %v1789 = vpack.c.b16 %v1740, %v1739
          %v1790 = vpack.c.b16 %v1742, %v1741
          %v1791 = vpack.c.b16 %v1744, %v1743
          %v1792 = vpack.c.b16 %v1746, %v1745
          %v1793 = vpack.c.b16 %v1748, %v1747
          %v1794 = vpack.c.b16 %v1750, %v1749
          %v1795 = vpack.c.b16 %v1752, %v1751
          %v1796 = vpack.c.b16 %v1754, %v1753
          %v1797 = vpack.c.b16 %v1756, %v1755
          %v1798 = vpack.c.b16 %v1758, %v1757
          %v1799 = vpack.c.b16 %v1760, %v1759
          %v1800 = vpack.c.b16 %v1762, %v1761
          %v1801 = vpack.c.b16 %v1764, %v1763
          %v1802 = vpack.c.b16 %v1766, %v1765
          %v1803 = vpack.c.b16 %v1768, %v1767
          %v1804 = vpack.c.b16 %v1770, %v1769
          %v1805 = vpack.c.b16 %v1772, %v1771
          %v1806 = vpack.c.b16 %v1774, %v1773
          %1839 = vmatpush.bf16.msra.mxu0 %v1782
          %1840 = vmatpush.bf16.msra.mxu0 %v1781
          %1841 = vmatpush.bf16.msra.mxu0 %v1780
          %1842 = vmatpush.bf16.msra.mxu0 %v1779
          %1843 = vmatpush.bf16.msra.mxu0 %v1778
          %1844 = vmatpush.bf16.msra.mxu0 %v1777
          %1845 = vmatpush.bf16.msra.mxu0 %v1776
          %1846 = vmatpush.bf16.msra.mxu0 %v1775
          %1847 = vmatmul.bf16.gmra.mxu0 %v1576
          %v1848 = vpop.f32.mrf.mxu0
          %v1849 = vadd.f32 0.0, %v1848
          %v1850 = vpop.f32.mrf.mxu0
          %v1851 = vadd.f32 0.0, %v1850
          %1852 = vdwg.mxu0
          %1853 = vmatpush.bf16.msra.mxu0 %v1790
          %1854 = vmatpush.bf16.msra.mxu0 %v1789
          %1855 = vmatpush.bf16.msra.mxu0 %v1788
          %1856 = vmatpush.bf16.msra.mxu0 %v1787
          %1857 = vmatpush.bf16.msra.mxu0 %v1786
          %1858 = vmatpush.bf16.msra.mxu0 %v1785
          %1859 = vmatpush.bf16.msra.mxu0 %v1784
          %1860 = vmatpush.bf16.msra.mxu0 %v1783
          %1861 = vmatmul.bf16.gmra.mxu0 %v1577
          %v1862 = vpop.f32.mrf.mxu0
          %v1863 = vadd.f32 %v1849, %v1862
          %v1864 = vpop.f32.mrf.mxu0
          %v1865 = vadd.f32 %v1851, %v1864
          %1866 = vdwg.mxu0
          %1867 = vmatpush.bf16.msra.mxu0 %v1798
          %1868 = vmatpush.bf16.msra.mxu0 %v1797
          %1869 = vmatpush.bf16.msra.mxu0 %v1796
          %1870 = vmatpush.bf16.msra.mxu0 %v1795
          %1871 = vmatpush.bf16.msra.mxu0 %v1794
          %1872 = vmatpush.bf16.msra.mxu0 %v1793
          %1873 = vmatpush.bf16.msra.mxu0 %v1792
          %1874 = vmatpush.bf16.msra.mxu0 %v1791
          %1875 = vmatmul.bf16.gmra.mxu0 %v1578
          %v1876 = vpop.f32.mrf.mxu0
          %v1877 = vadd.f32 %v1863, %v1876
          %v1878 = vpop.f32.mrf.mxu0
          %v1879 = vadd.f32 %v1865, %v1878
          %1880 = vdwg.mxu0
          %1881 = vmatpush.bf16.msra.mxu0 %v1806
          %1882 = vmatpush.bf16.msra.mxu0 %v1805
          %1883 = vmatpush.bf16.msra.mxu0 %v1804
          %1884 = vmatpush.bf16.msra.mxu0 %v1803
          %1885 = vmatpush.bf16.msra.mxu0 %v1802
          %1886 = vmatpush.bf16.msra.mxu0 %v1801
          %1887 = vmatpush.bf16.msra.mxu0 %v1800
          %1888 = vmatpush.bf16.msra.mxu0 %v1799
          %1889 = vmatmul.bf16.gmra.mxu0 %v1579
          %v1890 = vpop.f32.mrf.mxu0
          %v1891 = vadd.f32 %v1877, %v1890
          %v1892 = vpop.f32.mrf.mxu0
          %v1893 = vadd.f32 %v1879, %v1892
          %1894 = vdwg.mxu0
          %v1895 = vadd.f32 %v1444, %v1891
          %v1896 = vadd.f32 %v1445, %v1893
        $region97: #{tpu_custom_call.1} parent=87 // loop_footer
          %s1443 = sadd.s32 1, %s1439
        $region98: #{tpu_custom_call.1} parent=87 // loop_footer_branch
          %1438 = sbr.rel target = $region94
        $region99: #{tpu_custom_call.1} parent=87 // loop_exit
          _
        %v1897 = vld [vmem:[%s742] sm:$0x1]
        %v1899 = vperm.slane %v1897, 0
        %v1901 = vadd.f32 %v1444, %v1899
        %v1902 = vadd.f32 %v1445, %v1899
        %v1903 = vadd.f32 %v1435, %v1901
        %v1904 = vadd.f32 %v1436, %v1902
        %v1905 = vld [vmem:[%s745] sm:$0x1]
        %v1906 = vld [vmem:[%s748] sm:$0x1]
        %v1907 = vsel %vm817, %v1903, 0.0
        %1908 = vadd.xlane.f32.xlu0 %v1907
        %v1909 = vpop.xlane.xlu0 %1908
        %v1910 = vsel %vm817, %v1904, 0.0
        %1911 = vadd.xlane.f32.xlu0 %v1910
        %v1912 = vpop.xlane.xlu0 %1911
        %v1913 = vmul.f32 %v1909, %v1388
        %v1914 = vmul.f32 %v1912, %v1388
        %v1915 = vsub.f32 %v1903, %v1913
        %v1916 = vsub.f32 %v1904, %v1914
        %v1917 = vmul.f32 %v1915, %v1915
        %v1918 = vmul.f32 %v1916, %v1916
        %v1919 = vsel %vm817, %v1917, 0.0
        %1920 = vadd.xlane.f32.xlu0 %v1919
        %v1921 = vpop.xlane.xlu0 %1920
        %v1922 = vsel %vm817, %v1918, 0.0
        %1923 = vadd.xlane.f32.xlu0 %v1922
        %v1924 = vpop.xlane.xlu0 %1923
        %v1925 = vmul.f32 %v1921, %v1388
        %v1926 = vmul.f32 %v1924, %v1388
        %v1927 = vadd.f32 %v1925, 1e-05
        %v1928 = vadd.f32 %v1926, 1e-05
        %v1929 = vrsqrt.pop %v1927
        %v1930 = vmul.f32 %v1929, %v1927
        %v1931 = vmul.f32 %v1930, %v1929
        %v1932 = vmul.f32 0.5, %v1931
        %v1933 = vsub.f32 1.5, %v1932
        %v1934 = vmul.f32 %v1929, %v1933
        %vm1935 = vweird.f32 %v1927
        %vm1936 = vweird.f32 %v1929
        %vm1937 = vmor %vm1935, %vm1936
        %v1938 = vsel %vm1937, %v1929, %v1934
        %v1939 = vrsqrt.pop %v1928
        %v1940 = vmul.f32 %v1939, %v1928
        %v1941 = vmul.f32 %v1940, %v1939
        %v1942 = vmul.f32 0.5, %v1941
        %v1943 = vsub.f32 1.5, %v1942
        %v1944 = vmul.f32 %v1939, %v1943
        %vm1945 = vweird.f32 %v1928
        %vm1946 = vweird.f32 %v1939
        %vm1947 = vmor %vm1945, %vm1946
        %v1948 = vsel %vm1947, %v1939, %v1944
        %v1949 = vmul.f32 %v1915, %v1938
        %v1950 = vmul.f32 %v1916, %v1948
        %v1952 = vperm.slane %v1905, 0
        %v1954 = vmul.f32 %v1949, %v1952
        %v1955 = vmul.f32 %v1950, %v1952
        %v1957 = vperm.slane %v1906, 0
        %v1959 = vadd.f32 %v1954, %v1957
        %v1960 = vadd.f32 %v1955, %v1957
        %1961 = vst.msk [vmem:[#allocation2] sm:$0xff] %vm817, %v1959
        %1962 = vst.msk [vmem:[#allocation2 + $0x8] sm:$0xff] %vm817, %v1960
        %p1963 = scmp.eq.s32.totalorder %s34, 1
        // Predicated region
        $region100: #{tpu_custom_call.1} parent=87 // pred_check
          %p1964 = pneg %p1963
        $region101: #{tpu_custom_call.1} parent=87 // pred_check_branch
          %1966 = sbr.rel (%p1964) target = $region103
        $region102: #{tpu_custom_call.1} parent=87 // pred_region
          %v1967 = vsel %vm817, %v1959, 0.0
          %v1968 = vrot.slane %v1967, 4
          %v1969 = vadd.f32 %v1967, %v1968
          %v1970 = vrot.slane %v1969, 2
          %v1971 = vadd.f32 %v1969, %v1970
          %v1972 = vrot.slane %v1971, 1
          %v1973 = vadd.f32 %v1971, %v1972
          %v1974 = vsel %vm817, %v1960, 0.0
          %v1975 = vrot.slane %v1974, 4
          %v1976 = vadd.f32 %v1974, %v1975
          %v1977 = vrot.slane %v1976, 2
          %v1978 = vadd.f32 %v1976, %v1977
          %v1979 = vrot.slane %v1978, 1
          %v1980 = vadd.f32 %v1978, %v1979
          %v1981 = vrcp.pop 8.0
          %v1982 = vmul.f32 8.0, %v1981
          %v1983 = vsub.f32 1.0, %v1982
          %v1984 = vmul.f32 %v1981, %v1983
          %v1985 = vadd.f32 %v1981, %v1984
          %vm1986 = vweird.f32 %v1981
          %v1987 = vsel %vm1986, %v1981, %v1985
          %v1988 = vmul.f32 %v1973, %v1987
          %v1989 = vmul.f32 %v1980, %v1987
          %v1990 = vpack.c.bf16 %v1988, %v1988
          %v1991 = vpack.c.bf16 %v1989, %v1989
          %v1992 = vld [vmem:[%s15] sm:$0xf]
          %v1993 = vld [vmem:[%s15 + $0x4] sm:$0xf]
          %v1994 = vld [vmem:[%s15 + $0x8] sm:$0xf]
          %v1995 = vld [vmem:[%s15 + $0xc] sm:$0xf]
          %v1996 = vld [vmem:[%s16] sm:$0x1]
          %v1998 = vperm.slane %v1996, 0
          %v2002 = vunpack.c.l.b16 %v1990
          %v2003 = vunpack.c.l.b16 %v1991
          %vm2004 = vcmask 1041409
          %v2005 = vsel %vm2004, %v2003, %v2002
          %v2006 = vpack.c.b16 %v2005, %v2005
          %v2011 = vunpack.c.l.b16 %v1992
          %v2012 = vunpack.c.l.b16 %v1993
          %v2013 = vunpack.c.l.b16 %v1994
          %v2014 = vunpack.c.l.b16 %v1995
          %v2015 = vpack.c.b16 %v2012, %v2011
          %v2016 = vpack.c.b16 %v2014, %v2013
          %v2020 = vsel %vm817, %v2006, 0
          %2022 = vmatpush.bf16.msra.mxu0 0
          %2023 = vmatpush.bf16.msra.mxu0 0
          %2024 = vmatpush.bf16.msra.mxu0 0
          %2025 = vmatpush.bf16.msra.mxu0 0
          %2026 = vmatpush.bf16.msra.mxu0 0
          %2027 = vmatpush.bf16.msra.mxu0 0
          %2028 = vmatpush.bf16.msra.mxu0 %v2016
          %2029 = vmatpush.bf16.msra.mxu0 %v2015
          %2030 = vmatmul.bf16.gmra.mxu0 %v2020
          %v2031 = vpop.f32.mrf.mxu0
          %v2032 = vadd.f32 %v1998, %v2031
          %v2033 = vpop.f32.mrf.mxu0
          %2034 = vdwg.mxu0
          %vm2035 = vcmask 254976
          %2036 = vst.msk [vmem:[#allocation4] sm:$0x3] %vm2035, %v2032
        $region103: #{tpu_custom_call.1} parent=87 // pred_fallthru
          _
        // Predicated region
        $region104: #{tpu_custom_call.1} parent=87 // pred_check
          %p2037 = pneg %p481
        $region105: #{tpu_custom_call.1} parent=87 // pred_check_branch
          %2039 = sbr.rel (%p2037) target = $region107
        $region106: #{tpu_custom_call.1} parent=87 // pred_region
          %2041 = vsyncadd [#allocation5], 0
          %s2042 = smul.addr %s33, 2
          %s2043 = scalar_lea.hbm %s17, %s2042
          %s2045 = sshll.u32 [#allocation4], 4
          %s2046 = int_to_ptr.vmem [resolvable:$true] %s2045
          %s2047 = sshll.u32 %s2043, 4
          %s2048 = int_to_ptr.hbm [resolvable:$true] %s2047
          %2050 = dma.vmem_to_hbm [thread:$0]  %s2046, 32, %s2048, [#allocation5]
        $region107: #{tpu_custom_call.1} parent=87 // pred_fallthru
          _
        // Predicated region
        $region108: #{tpu_custom_call.1} parent=87 // pred_check
          %p2051 = pneg %p481
        $region109: #{tpu_custom_call.1} parent=87 // pred_check_branch
          %2053 = sbr.rel (%p2051) target = $region111
        $region110: #{tpu_custom_call.1} parent=87 // pred_region
          %2055 = dma.done [#allocation5], 32
        $region111: #{tpu_custom_call.1} parent=87 // pred_fallthru
          _
      $region88: #{tpu_custom_call.1} parent=5 // pred_fallthru
        _
      %p2056 = scmp.le.s32.totalorder 2, %s24
      // Predicated region
      $region112: #{tpu_custom_call.1} parent=5 // pred_check
        %p2057 = pneg %p2056
      $region113: #{tpu_custom_call.1} parent=5 // pred_check_branch
        %2059 = sbr.rel (%p2057) target = $region115
      $region114: #{tpu_custom_call.1} parent=5 // pred_region
        %s2060 = ssub.s32 %s24, 2
      $region115: #{tpu_custom_call.1} parent=5 // pred_fallthru
        _
    $region6: #{tpu_custom_call.1} parent=1 // loop_footer
      %s28 = sadd.s32 1, %s24
    $region7: #{tpu_custom_call.1} parent=1 // loop_footer_branch
      %23 = sbr.rel target = $region3
    $region8: #{tpu_custom_call.1} parent=1 // loop_exit
      _
    %2061 = vsyncpa [#allocation5], 1
    %s2062 = scalar_lea.sflag [#allocation5], 1
    %2063 = vsyncpa %s2062, 1

</llo_original>
